<compile_context>
chip_gen: v6e
topology: v6e:2x2x1
jax: 0.10.0
libtpu: 0.0.40
codegen_flags: <defaults>
</compile_context>

<pallas_src>
import functools

import numpy as np
import jax
import jax.numpy as jnp
from jax.experimental import pallas as pl
from jax.experimental.pallas import tpu as pltpu

# Inter-stage activation dtype (HBM round trips between the two conv stages).
# BN statistics / scale / shift are always accumulated and applied in f32.
ACTIVATION_DTYPE = jnp.bfloat16


def _round_up(v, m):
    return (v + m - 1) // m * m


def _pad_col(v, c_p):
    """(C,) -> zero-padded (C_pad, 1) f32 column."""
    v = jnp.asarray(v, jnp.float32).reshape(-1)
    if v.shape[0] != c_p:
        v = jnp.pad(v, (0, c_p - v.shape[0]))
    return v.reshape(c_p, 1)


def _tap_masks(img_h, img_w, reps):
    """(9, 1, reps*H*W) f32 validity masks for the 3x3 taps (zero padding).

    Tiled `reps` times so that, with `reps` samples laid end-to-end on the
    lane axis, the same masks also zero any cross-sample / wrap-around bleed
    introduced by the lane rolls.
    """
    hh, ww = np.meshgrid(np.arange(img_h), np.arange(img_w), indexing="ij")
    masks = []
    for dh in (-1, 0, 1):
        for dw in (-1, 0, 1):
            ok = ((hh + dh >= 0) & (hh + dh < img_h) &
                  (ww + dw >= 0) & (ww + dw < img_w)).reshape(-1)
            masks.append(np.tile(ok, reps))
    return jnp.asarray(np.stack(masks)[:, None, :], dtype=jnp.float32)


def _pick_batch_tile(n, cin_p, cout_p, hw, budget_bytes=8 << 20):
    """Largest divisor of n whose per-step working set stays well under VMEM."""
    per_sample = hw * (cin_p * 4 * 2          # f32 x tile (plus BN'd copy)
                       + 9 * cin_p * 4        # f32 taps before the bf16 cast
                       + 9 * cin_p * 2        # bf16 im2col patch
                       + cout_p * 4           # f32 accumulator
                       + cout_p * 2 * 2)      # double-buffered bf16 output
    nb = max(1, min(n, budget_bytes // max(per_sample, 1)))
    while n % nb:
        nb -= 1
    return nb


# ------------------- fused [BN+ReLU] -> conv3x3 -> stats --------------------
def _fused_conv_kernel(x_ref, w_ref, b_ref, gamma_ref, beta_ref,
                       insum_ref, insq_ref, masks_ref,
                       o_ref, osum_ref, osq_ref,
                       scale_sc, shift_sc, sum_sc, sq_sc,
                       *, tile_lanes, img_w, apply_input_bn, in_count, eps):
    step = pl.program_id(0)
    nsteps = pl.num_programs(0)

    @pl.when(step == 0)
    def _init():
        sum_sc[...] = jnp.zeros_like(sum_sc)
        sq_sc[...] = jnp.zeros_like(sq_sc)
        if apply_input_bn:
            # Previous stage's BatchNorm(train) scale/shift, computed ONCE and
            # reused on every grid step (rsqrt rides the idle EUP slot).
            inv_n = 1.0 / in_count
            mean = insum_ref[...] * inv_n                  # (Cin_p, 1)
            var = insq_ref[...] * inv_n - mean * mean      # biased batch var
            scale_sc[...] = gamma_ref[...] * jax.lax.rsqrt(var + eps)
            shift_sc[...] = beta_ref[...] - mean * scale_sc[...]

    x = x_ref[...].astype(jnp.float32)                     # (Cin_p, nb*H*W)

    if apply_input_bn:
        # Previous stage's BN + ReLU fused into this prologue (f32 VPU math).
        x = jnp.maximum(x * scale_sc[...] + shift_sc[...], 0.0)

    # 3x3 tap assembly: 8 lane rolls (XLU) + boundary masks; center tap is x
    # itself and needs no mask.  Wrapped lanes (image border, sample boundary,
    # global wrap) are exactly the mask-zeroed positions.
    taps = []
    t = 0
    for dh in (-1, 0, 1):
        for dw in (-1, 0, 1):
            off = dh * img_w + dw
            if off == 0:
                taps.append(x)
            else:
                rolled = pltpu.roll(x, shift=(-off) % tile_lanes, axis=1)
                taps.append(rolled * masks_ref[t])
            t += 1
    # TODO(synk): for large Cin (real UNet stages) accumulate 9 per-tap dots
    # instead of materializing the 9x patch, so VMEM stays bounded on v7x.
    patch = jnp.concatenate(taps, axis=0).astype(jnp.bfloat16)  # (9*Cin_p, L)

    # Single bf16 im2col contraction on the MXU, f32 accumulation.
    acc = jnp.dot(w_ref[...], patch,
                  preferred_element_type=jnp.float32)      # (Cout_p, L) f32
    acc = acc + b_ref[...]                                  # (Cout_p, 1) bcast

    # This conv's BatchNorm batch statistics (training mode), f32.
    sum_sc[...] += jnp.sum(acc, axis=1, keepdims=True)
    sq_sc[...] += jnp.sum(acc * acc, axis=1, keepdims=True)

    o_ref[...] = acc.astype(o_ref.dtype)                    # lane-dense store

    @pl.when(step == nsteps - 1)
    def _finalize():
        osum_ref[...] = sum_sc[...]
        osq_ref[...] = sq_sc[...]


def conv_bn_stage(x, w_pt, b_pt, *, in_gamma, in_beta, in_sum, in_sq,
                  apply_input_bn, n_total, img_h, img_w, batch_tile, eps):
    """x: (Cin_p, N*H*W) channels-major.  Returns (y, sum, sumsq)."""
    cin_p, total_lanes = x.shape
    hw = img_h * img_w
    assert total_lanes == n_total * hw
    nb = batch_tile
    assert n_total % nb == 0
    tile_lanes = nb * hw
    grid = (n_total // nb,)

    cout, cin, ksz_h, ksz_w = w_pt.shape
    assert (ksz_h, ksz_w) == (3, 3) and cin <= cin_p
    cout_p = _round_up(cout, 8)

    # im2col weight matrix ordered (kh, kw, cin) to match the tap concat order;
    # zero-pad cin->cin_p (so padded input channels hit zero columns) and
    # cout->cout_p (so padded output channels come out exactly zero).  bf16
    # for the MXU; bias stays f32 and is added post-dot.
    wmat = jnp.transpose(w_pt, (0, 2, 3, 1)).astype(jnp.float32)  # (Co,3,3,Ci)
    wmat = jnp.pad(wmat, ((0, cout_p - cout), (0, 0), (0, 0), (0, cin_p - cin)))
    wmat = wmat.reshape(cout_p, 9 * cin_p).astype(jnp.bfloat16)
    bcol = _pad_col(b_pt, cout_p)

    if apply_input_bn:
        gamma = _pad_col(in_gamma, cin_p)
        beta = _pad_col(in_beta, cin_p)
        s_in = in_sum
        q_in = in_sq
        assert s_in.shape == (cin_p, 1) and q_in.shape == (cin_p, 1)
    else:
        gamma = jnp.zeros((cin_p, 1), jnp.float32)
        beta = jnp.zeros((cin_p, 1), jnp.float32)
        s_in = jnp.zeros((cin_p, 1), jnp.float32)
        q_in = jnp.zeros((cin_p, 1), jnp.float32)

    masks = _tap_masks(img_h, img_w, nb)                    # (9, 1, nb*H*W)

    kernel = functools.partial(
        _fused_conv_kernel, tile_lanes=tile_lanes, img_w=img_w,
        apply_input_bn=apply_input_bn, in_count=float(n_total * hw),
        eps=float(eps))

    out_shape = (jax.ShapeDtypeStruct((cout_p, total_lanes), ACTIVATION_DTYPE),
                 jax.ShapeDtypeStruct((cout_p, 1), jnp.float32),
                 jax.ShapeDtypeStruct((cout_p, 1), jnp.float32))

    grid_spec = pltpu.PrefetchScalarGridSpec(
        num_scalar_prefetch=0,
        grid=grid,
        in_specs=[
            pl.BlockSpec((cin_p, tile_lanes), lambda i: (0, i)),
            pl.BlockSpec((cout_p, 9 * cin_p), lambda i: (0, 0)),
            pl.BlockSpec((cout_p, 1), lambda i: (0, 0)),
            pl.BlockSpec((cin_p, 1), lambda i: (0, 0)),
            pl.BlockSpec((cin_p, 1), lambda i: (0, 0)),
            pl.BlockSpec((cin_p, 1), lambda i: (0, 0)),
            pl.BlockSpec((cin_p, 1), lambda i: (0, 0)),
            pl.BlockSpec((9, 1, tile_lanes), lambda i: (0, 0, 0)),
        ],
        out_specs=(pl.BlockSpec((cout_p, tile_lanes), lambda i: (0, i)),
                   pl.BlockSpec((cout_p, 1), lambda i: (0, 0)),
                   pl.BlockSpec((cout_p, 1), lambda i: (0, 0))),
        scratch_shapes=[pltpu.VMEM((cin_p, 1), jnp.float32),   # BN scale
                        pltpu.VMEM((cin_p, 1), jnp.float32),   # BN shift
                        pltpu.VMEM((cout_p, 1), jnp.float32),  # sum acc
                        pltpu.VMEM((cout_p, 1), jnp.float32)], # sumsq acc
    )

    return pl.pallas_call(
        kernel,
        out_shape=out_shape,
        grid_spec=grid_spec,
        compiler_params=pltpu.CompilerParams(
            # Sequential: BN statistics accumulate in scratch across steps.
            # (For v7x megacore with multi-step grids, emit per-step partial
            # sums instead and mark this axis "parallel".)
            dimension_semantics=("arbitrary",)),
    )(x, wmat, bcol, gamma, beta, s_in, q_in, masks)


# --------------------------- final BN + ReLU kernel --------------------------
def _bn_relu_kernel(x_ref, gamma_ref, beta_ref, sum_ref, sq_ref, o_ref,
                    *, count, eps):
    inv_n = 1.0 / count
    mean = sum_ref[...] * inv_n                             # (C_p, 1)
    var = sq_ref[...] * inv_n - mean * mean
    scale = gamma_ref[...] * jax.lax.rsqrt(var + eps)
    shift = beta_ref[...] - mean * scale
    x = x_ref[...].astype(jnp.float32)                      # (C_p, L)
    o_ref[...] = jnp.maximum(x * scale + shift, 0.0).astype(o_ref.dtype)


def bn_relu(x, gamma, beta, s, q, *, count, batch_tile, hw, eps):
    # TODO(synk): in the full UNet this trailing BN+ReLU would be folded into
    # the NEXT block's conv prologue (as BN1 is folded into stage 2 here).
    c_p, total_lanes = x.shape
    tile_lanes = batch_tile * hw
    grid = (total_lanes // tile_lanes,)
    kernel = functools.partial(_bn_relu_kernel, count=float(count),
                               eps=float(eps))
    return pl.pallas_call(
        kernel,
        out_shape=jax.ShapeDtypeStruct((c_p, total_lanes), jnp.float32),
        grid_spec=pltpu.PrefetchScalarGridSpec(
            num_scalar_prefetch=0,
            grid=grid,
            in_specs=[pl.BlockSpec((c_p, tile_lanes), lambda i: (0, i)),
                      pl.BlockSpec((c_p, 1), lambda i: (0, 0)),
                      pl.BlockSpec((c_p, 1), lambda i: (0, 0)),
                      pl.BlockSpec((c_p, 1), lambda i: (0, 0)),
                      pl.BlockSpec((c_p, 1), lambda i: (0, 0))],
            out_specs=pl.BlockSpec((c_p, tile_lanes), lambda i: (0, i)),
        ),
        compiler_params=pltpu.CompilerParams(
            dimension_semantics=("parallel",)),
    )(x, _pad_col(gamma, c_p), _pad_col(beta, c_p), s, q)


# -------------------------------- full module --------------------------------
def cov_forward(x_nchw, params, eps=1e-5):
    """cov.forward: (conv3x3 -> BN(train) -> ReLU) x 2.  Input/output NCHW f32.

    Note: only the normalization path of BatchNorm is reproduced.
    # TODO(synk): PyTorch also updates running_mean/running_var in training
    # mode; that state update is not emitted here.
    """
    n, cin, h, w = x_nchw.shape
    hw = h * w
    cin_p = _round_up(cin, 8)
    cout1 = params["w1"].shape[0]
    cout1_p = _round_up(cout1, 8)
    cout2 = params["w2"].shape[0]
    cout2_p = _round_up(cout2, 8)

    # Channels-major with all samples end-to-end on the lane axis:
    # (Cin_p, N*H*W).  One boundary transpose in / one out for the block.
    x = jnp.transpose(x_nchw.reshape(n, cin, hw), (1, 0, 2)).reshape(cin, n * hw)
    x = x.astype(jnp.float32)
    if cin_p != cin:
        x = jnp.pad(x, ((0, cin_p - cin), (0, 0)))

    nb1 = _pick_batch_tile(n, cin_p, cout1_p, hw)
    nb2 = _pick_batch_tile(n, cout1_p, cout2_p, hw)

    # Stage 1: conv1 (+bias) and BN1 batch statistics, fused.
    y1, s1, q1 = conv_bn_stage(
        x, params["w1"], params["b1"],
        in_gamma=None, in_beta=None, in_sum=None, in_sq=None,
        apply_input_bn=False, n_total=n, img_h=h, img_w=w,
        batch_tile=nb1, eps=eps)

    # Stage 2: BN1+ReLU prologue, conv2 (+bias), BN2 statistics, fused.
    y2, s2, q2 = conv_bn_stage(
        y1, params["w2"], params["b2"],
        in_gamma=params["gamma1"], in_beta=params["beta1"],
        in_sum=s1, in_sq=q1, apply_input_bn=True,
        n_total=n, img_h=h, img_w=w, batch_tile=nb2, eps=eps)

    # Final BN2 + ReLU.
    out = bn_relu(y2, params["gamma2"], params["beta2"], s2, q2,
                  count=n * hw, batch_tile=nb2, hw=hw, eps=eps)

    out = out[:cout2].reshape(cout2, n, hw)
    return jnp.transpose(out, (1, 0, 2)).reshape(n, cout2, h, w)


# ----------------------------- pure-JAX reference ----------------------------
def _reference(x_nchw, params, eps=1e-5):
    def stage(x, w, b, gamma, beta):
        y = jax.lax.conv_general_dilated(
            x, w, window_strides=(1, 1), padding=((1, 1), (1, 1)),
            dimension_numbers=("NCHW", "OIHW", "NCHW"))
        y = y + b.reshape(1, -1, 1, 1)
        mean = jnp.mean(y, axis=(0, 2, 3), keepdims=True)
        var = jnp.var(y, axis=(0, 2, 3), keepdims=True)   # biased, as PyTorch
        y = (y - mean) * jax.lax.rsqrt(var + eps)
        y = y * gamma.reshape(1, -1, 1, 1) + beta.reshape(1, -1, 1, 1)
        return jnp.maximum(y, 0.0)

    y = stage(x_nchw, params["w1"], params["b1"],
              params["gamma1"], params["beta1"])
    return stage(y, params["w2"], params["b2"],
                 params["gamma2"], params["beta2"])


if __name__ == "__main__":
    key = jax.random.PRNGKey(0)
    k1, k2, k3, k4, kx = jax.random.split(key, 5)

    in_channels, out_channels = 4, 8
    N, H, W = 2, 16, 16

    # PyTorch-layout parameters: conv weight (Cout, Cin, 3, 3), bias (Cout,),
    # BatchNorm affine gamma/beta (Cout,) (PyTorch defaults gamma=1, beta=0).
    params = {
        "w1": 0.1 * jax.random.normal(k1, (out_channels, in_channels, 3, 3),
                                      jnp.float32),
        "b1": 0.1 * jax.random.normal(k2, (out_channels,), jnp.float32),
        "gamma1": jnp.ones((out_channels,), jnp.float32),
        "beta1": jnp.zeros((out_channels,), jnp.float32),
        "w2": 0.1 * jax.random.normal(k3, (out_channels, out_channels, 3, 3),
                                      jnp.float32),
        "b2": 0.1 * jax.random.normal(k4, (out_channels,), jnp.float32),
        "gamma2": jnp.ones((out_channels,), jnp.float32),
        "beta2": jnp.zeros((out_channels,), jnp.float32),
    }

    x = jax.random.normal(kx, (N, in_channels, H, W), jnp.float32)

    out = jax.jit(cov_forward)(x, params)
    jax.block_until_ready(out)
    assert out.shape == (N, out_channels, H, W)

    # Loose tolerance: the MXU / inter-stage activation path is bf16.
    ref = _reference(x, params)
    max_err = float(jnp.max(jnp.abs(out - ref)))
    assert max_err < 0.25, f"max abs error vs f32 reference: {max_err}"

    print("KERNEL_OK")
</pallas_src>

<mosaic_0001>
module attributes {stable_mosaic.version = 11 : i64} {
  func.func @_bn_relu_kernel(%arg0: i32, %arg1: memref<8x512xbf16, #tpu.memory_space<vmem>>, %arg2: memref<8x1xf32, #tpu.memory_space<vmem>>, %arg3: memref<8x1xf32, #tpu.memory_space<vmem>>, %arg4: memref<8x1xf32, #tpu.memory_space<vmem>>, %arg5: memref<8x1xf32, #tpu.memory_space<vmem>>, %arg6: memref<8x512xf32, #tpu.memory_space<vmem>>) attributes {dimension_semantics = [#tpu.dimension_semantics<parallel>], iteration_bounds = array<i64: 1>, scalar_prefetch = 0 : i64, scratch_operands = 0 : i64, tpu.core_type = #tpu.core_type<tc>, window_params = [{transform_indices = @transform_0, window_bounds = array<i64: 8, 512>}, {pipeline_mode = #tpu.pipeline_mode<synchronous>, transform_indices = @transform_1, window_bounds = array<i64: 8, 1>}, {pipeline_mode = #tpu.pipeline_mode<synchronous>, transform_indices = @transform_2, window_bounds = array<i64: 8, 1>}, {pipeline_mode = #tpu.pipeline_mode<synchronous>, transform_indices = @transform_3, window_bounds = array<i64: 8, 1>}, {pipeline_mode = #tpu.pipeline_mode<synchronous>, transform_indices = @transform_4, window_bounds = array<i64: 8, 1>}, {transform_indices = @transform_5, window_bounds = array<i64: 8, 512>}]} {
    %c0 = arith.constant 0 : index
    %c0_0 = arith.constant 0 : index
    %0 = vector.load %arg4[%c0, %c0_0] : memref<8x1xf32, #tpu.memory_space<vmem>>, vector<8x1xf32>
    %cst = arith.constant 0.001953125 : f32
    %1 = vector.broadcast %cst : f32 to vector<8x1xf32>
    %2 = arith.mulf %0, %1 : vector<8x1xf32>
    %c0_1 = arith.constant 0 : index
    %c0_2 = arith.constant 0 : index
    %3 = vector.load %arg5[%c0_1, %c0_2] : memref<8x1xf32, #tpu.memory_space<vmem>>, vector<8x1xf32>
    %cst_3 = arith.constant 0.001953125 : f32
    %4 = vector.broadcast %cst_3 : f32 to vector<8x1xf32>
    %5 = arith.mulf %3, %4 : vector<8x1xf32>
    %6 = arith.mulf %2, %2 : vector<8x1xf32>
    %7 = arith.subf %5, %6 : vector<8x1xf32>
    %c0_4 = arith.constant 0 : index
    %c0_5 = arith.constant 0 : index
    %8 = vector.load %arg2[%c0_4, %c0_5] : memref<8x1xf32, #tpu.memory_space<vmem>>, vector<8x1xf32>
    %cst_6 = arith.constant 9.99999974E-6 : f32
    %9 = vector.broadcast %cst_6 : f32 to vector<8x1xf32>
    %10 = arith.addf %7, %9 : vector<8x1xf32>
    %11 = math.rsqrt %10 : vector<8x1xf32>
    %12 = arith.mulf %8, %11 : vector<8x1xf32>
    %c0_7 = arith.constant 0 : index
    %c0_8 = arith.constant 0 : index
    %13 = vector.load %arg3[%c0_7, %c0_8] : memref<8x1xf32, #tpu.memory_space<vmem>>, vector<8x1xf32>
    %14 = arith.mulf %2, %12 : vector<8x1xf32>
    %15 = arith.subf %13, %14 : vector<8x1xf32>
    %c0_9 = arith.constant 0 : index
    %c0_10 = arith.constant 0 : index
    %16 = vector.load %arg1[%c0_9, %c0_10] : memref<8x512xbf16, #tpu.memory_space<vmem>>, vector<8x512xbf16>
    %17 = arith.extf %16 : vector<8x512xbf16> to vector<8x512xf32>
    %18 = vector.broadcast %12 : vector<8x1xf32> to vector<8x512xf32>
    %19 = arith.mulf %17, %18 : vector<8x512xf32>
    %20 = vector.broadcast %15 : vector<8x1xf32> to vector<8x512xf32>
    %21 = arith.addf %19, %20 : vector<8x512xf32>
    %cst_11 = arith.constant 0.000000e+00 : f32
    %22 = vector.broadcast %cst_11 : f32 to vector<8x512xf32>
    %23 = arith.maximumf %21, %22 : vector<8x512xf32>
    %c0_12 = arith.constant 0 : index
    %c0_13 = arith.constant 0 : index
    %24 = vector.load %arg6[%c0_12, %c0_13] : memref<8x512xf32, #tpu.memory_space<vmem>>, vector<8x512xf32>
    tpu.vector_store %arg6[%c0_12, %c0_13], %23 {strides = array<i32>} : memref<8x512xf32, #tpu.memory_space<vmem>>, vector<8x512xf32>,
    return
  }
  func.func @transform_0(%arg0: i32) -> (i32, i32) {
    %c0_i32 = arith.constant 0 : i32
    %c0_i32_0 = arith.constant 0 : i32
    return %c0_i32, %arg0 : i32, i32
  }
  func.func @transform_1(%arg0: i32) -> (i32, i32) {
    %c0_i32 = arith.constant 0 : i32
    %c0_i32_0 = arith.constant 0 : i32
    %c0_i32_1 = arith.constant 0 : i32
    return %c0_i32, %c0_i32_0 : i32, i32
  }
  func.func @transform_2(%arg0: i32) -> (i32, i32) {
    %c0_i32 = arith.constant 0 : i32
    %c0_i32_0 = arith.constant 0 : i32
    %c0_i32_1 = arith.constant 0 : i32
    return %c0_i32, %c0_i32_0 : i32, i32
  }
  func.func @transform_3(%arg0: i32) -> (i32, i32) {
    %c0_i32 = arith.constant 0 : i32
    %c0_i32_0 = arith.constant 0 : i32
    %c0_i32_1 = arith.constant 0 : i32
    return %c0_i32, %c0_i32_0 : i32, i32
  }
  func.func @transform_4(%arg0: i32) -> (i32, i32) {
    %c0_i32 = arith.constant 0 : i32
    %c0_i32_0 = arith.constant 0 : i32
    %c0_i32_1 = arith.constant 0 : i32
    return %c0_i32, %c0_i32_0 : i32, i32
  }
  func.func @transform_5(%arg0: i32) -> (i32, i32) {
    %c0_i32 = arith.constant 0 : i32
    %c0_i32_0 = arith.constant 0 : i32
    return %c0_i32, %arg0 : i32, i32
  }
}

module attributes {stable_mosaic.version = 11 : i64} {
  func.func @_fused_conv_kernel(%arg0: i32, %arg1: memref<8x512xf32, #tpu.memory_space<vmem>>, %arg2: memref<8x72xbf16, #tpu.memory_space<vmem>>, %arg3: memref<8x1xf32, #tpu.memory_space<vmem>>, %arg4: memref<8x1xf32, #tpu.memory_space<vmem>>, %arg5: memref<8x1xf32, #tpu.memory_space<vmem>>, %arg6: memref<8x1xf32, #tpu.memory_space<vmem>>, %arg7: memref<8x1xf32, #tpu.memory_space<vmem>>, %arg8: memref<9x1x512xf32, #tpu.memory_space<vmem>>, %arg9: memref<8x512xbf16, #tpu.memory_space<vmem>>, %arg10: memref<8x1xf32, #tpu.memory_space<vmem>>, %arg11: memref<8x1xf32, #tpu.memory_space<vmem>>, %arg12: memref<8x1xf32, #tpu.memory_space<vmem>>, %arg13: memref<8x1xf32, #tpu.memory_space<vmem>>, %arg14: memref<8x1xf32, #tpu.memory_space<vmem>>, %arg15: memref<8x1xf32, #tpu.memory_space<vmem>>) attributes {dimension_semantics = [#tpu.dimension_semantics<arbitrary>], iteration_bounds = array<i64: 1>, scalar_prefetch = 0 : i64, scratch_operands = 4 : i64, tpu.core_type = #tpu.core_type<tc>, window_params = [{transform_indices = @transform_0, window_bounds = array<i64: 8, 512>}, {pipeline_mode = #tpu.pipeline_mode<synchronous>, transform_indices = @transform_1, window_bounds = array<i64: 8, 72>}, {pipeline_mode = #tpu.pipeline_mode<synchronous>, transform_indices = @transform_2, window_bounds = array<i64: 8, 1>}, {pipeline_mode = #tpu.pipeline_mode<synchronous>, transform_indices = @transform_3, window_bounds = array<i64: 8, 1>}, {pipeline_mode = #tpu.pipeline_mode<synchronous>, transform_indices = @transform_4, window_bounds = array<i64: 8, 1>}, {pipeline_mode = #tpu.pipeline_mode<synchronous>, transform_indices = @transform_5, window_bounds = array<i64: 8, 1>}, {pipeline_mode = #tpu.pipeline_mode<synchronous>, transform_indices = @transform_6, window_bounds = array<i64: 8, 1>}, {pipeline_mode = #tpu.pipeline_mode<synchronous>, transform_indices = @transform_7, window_bounds = array<i64: 9, 1, 512>}, {transform_indices = @transform_8, window_bounds = array<i64: 8, 512>}, {pipeline_mode = #tpu.pipeline_mode<synchronous>, transform_indices = @transform_9, window_bounds = array<i64: 8, 1>}, {pipeline_mode = #tpu.pipeline_mode<synchronous>, transform_indices = @transform_10, window_bounds = array<i64: 8, 1>}]} {
    %c0_i32 = arith.constant 0 : i32
    %0 = arith.cmpi eq, %arg0, %c0_i32 : i32
    %1 = arith.extui %0 : i1 to i32
    %c0_i32_0 = arith.constant 0 : i32
    %2 = arith.cmpi ne, %1, %c0_i32_0 : i32
    scf.if %2 {
      %cst_37 = arith.constant 0.000000e+00 : f32
      %67 = vector.broadcast %cst_37 : f32 to vector<8x1xf32>
      %c0_38 = arith.constant 0 : index
      %c0_39 = arith.constant 0 : index
      %68 = vector.load %arg14[%c0_38, %c0_39] : memref<8x1xf32, #tpu.memory_space<vmem>>, vector<8x1xf32>
      tpu.vector_store %arg14[%c0_38, %c0_39], %67 {strides = array<i32>} : memref<8x1xf32, #tpu.memory_space<vmem>>, vector<8x1xf32>,
      %cst_40 = arith.constant 0.000000e+00 : f32
      %69 = vector.broadcast %cst_40 : f32 to vector<8x1xf32>
      %c0_41 = arith.constant 0 : index
      %c0_42 = arith.constant 0 : index
      %70 = vector.load %arg15[%c0_41, %c0_42] : memref<8x1xf32, #tpu.memory_space<vmem>>, vector<8x1xf32>
      tpu.vector_store %arg15[%c0_41, %c0_42], %69 {strides = array<i32>} : memref<8x1xf32, #tpu.memory_space<vmem>>, vector<8x1xf32>,
    } else {
    }
    %c0 = arith.constant 0 : index
    %c0_1 = arith.constant 0 : index
    %3 = vector.load %arg1[%c0, %c0_1] : memref<8x512xf32, #tpu.memory_space<vmem>>, vector<8x512xf32>
    %c17_i32 = arith.constant 17 : i32
    %4 = tpu.dynamic_rotate %3 by %c17_i32 dim 1 : vector<8x512xf32>, i32 -> vector<8x512xf32>
    %c0_2 = arith.constant 0 : index
    %c0_3 = arith.constant 0 : index
    %c0_4 = arith.constant 0 : index
    %5 = vector.load %arg8[%c0_2, %c0_3, %c0_4] : memref<9x1x512xf32, #tpu.memory_space<vmem>>, vector<1x1x512xf32>
    %6 = vector.shape_cast %5 : vector<1x1x512xf32> to vector<1x512xf32>
    %7 = vector.broadcast %6 : vector<1x512xf32> to vector<8x512xf32>
    %8 = arith.mulf %4, %7 : vector<8x512xf32>
    %c16_i32 = arith.constant 16 : i32
    %9 = tpu.dynamic_rotate %3 by %c16_i32 dim 1 : vector<8x512xf32>, i32 -> vector<8x512xf32>
    %c1 = arith.constant 1 : index
    %c0_5 = arith.constant 0 : index
    %c0_6 = arith.constant 0 : index
    %10 = vector.load %arg8[%c1, %c0_5, %c0_6] : memref<9x1x512xf32, #tpu.memory_space<vmem>>, vector<1x1x512xf32>
    %11 = vector.shape_cast %10 : vector<1x1x512xf32> to vector<1x512xf32>
    %12 = vector.broadcast %11 : vector<1x512xf32> to vector<8x512xf32>
    %13 = arith.mulf %9, %12 : vector<8x512xf32>
    %c15_i32 = arith.constant 15 : i32
    %14 = tpu.dynamic_rotate %3 by %c15_i32 dim 1 : vector<8x512xf32>, i32 -> vector<8x512xf32>
    %c2 = arith.constant 2 : index
    %c0_7 = arith.constant 0 : index
    %c0_8 = arith.constant 0 : index
    %15 = vector.load %arg8[%c2, %c0_7, %c0_8] : memref<9x1x512xf32, #tpu.memory_space<vmem>>, vector<1x1x512xf32>
    %16 = vector.shape_cast %15 : vector<1x1x512xf32> to vector<1x512xf32>
    %17 = vector.broadcast %16 : vector<1x512xf32> to vector<8x512xf32>
    %18 = arith.mulf %14, %17 : vector<8x512xf32>
    %c1_i32 = arith.constant 1 : i32
    %19 = tpu.dynamic_rotate %3 by %c1_i32 dim 1 : vector<8x512xf32>, i32 -> vector<8x512xf32>
    %c3 = arith.constant 3 : index
    %c0_9 = arith.constant 0 : index
    %c0_10 = arith.constant 0 : index
    %20 = vector.load %arg8[%c3, %c0_9, %c0_10] : memref<9x1x512xf32, #tpu.memory_space<vmem>>, vector<1x1x512xf32>
    %21 = vector.shape_cast %20 : vector<1x1x512xf32> to vector<1x512xf32>
    %22 = vector.broadcast %21 : vector<1x512xf32> to vector<8x512xf32>
    %23 = arith.mulf %19, %22 : vector<8x512xf32>
    %c511_i32 = arith.constant 511 : i32
    %24 = tpu.dynamic_rotate %3 by %c511_i32 dim 1 : vector<8x512xf32>, i32 -> vector<8x512xf32>
    %c5 = arith.constant 5 : index
    %c0_11 = arith.constant 0 : index
    %c0_12 = arith.constant 0 : index
    %25 = vector.load %arg8[%c5, %c0_11, %c0_12] : memref<9x1x512xf32, #tpu.memory_space<vmem>>, vector<1x1x512xf32>
    %26 = vector.shape_cast %25 : vector<1x1x512xf32> to vector<1x512xf32>
    %27 = vector.broadcast %26 : vector<1x512xf32> to vector<8x512xf32>
    %28 = arith.mulf %24, %27 : vector<8x512xf32>
    %c497_i32 = arith.constant 497 : i32
    %29 = tpu.dynamic_rotate %3 by %c497_i32 dim 1 : vector<8x512xf32>, i32 -> vector<8x512xf32>
    %c6 = arith.constant 6 : index
    %c0_13 = arith.constant 0 : index
    %c0_14 = arith.constant 0 : index
    %30 = vector.load %arg8[%c6, %c0_13, %c0_14] : memref<9x1x512xf32, #tpu.memory_space<vmem>>, vector<1x1x512xf32>
    %31 = vector.shape_cast %30 : vector<1x1x512xf32> to vector<1x512xf32>
    %32 = vector.broadcast %31 : vector<1x512xf32> to vector<8x512xf32>
    %33 = arith.mulf %29, %32 : vector<8x512xf32>
    %c496_i32 = arith.constant 496 : i32
    %34 = tpu.dynamic_rotate %3 by %c496_i32 dim 1 : vector<8x512xf32>, i32 -> vector<8x512xf32>
    %c7 = arith.constant 7 : index
    %c0_15 = arith.constant 0 : index
    %c0_16 = arith.constant 0 : index
    %35 = vector.load %arg8[%c7, %c0_15, %c0_16] : memref<9x1x512xf32, #tpu.memory_space<vmem>>, vector<1x1x512xf32>
    %36 = vector.shape_cast %35 : vector<1x1x512xf32> to vector<1x512xf32>
    %37 = vector.broadcast %36 : vector<1x512xf32> to vector<8x512xf32>
    %38 = arith.mulf %34, %37 : vector<8x512xf32>
    %c495_i32 = arith.constant 495 : i32
    %39 = tpu.dynamic_rotate %3 by %c495_i32 dim 1 : vector<8x512xf32>, i32 -> vector<8x512xf32>
    %c8 = arith.constant 8 : index
    %c0_17 = arith.constant 0 : index
    %c0_18 = arith.constant 0 : index
    %40 = vector.load %arg8[%c8, %c0_17, %c0_18] : memref<9x1x512xf32, #tpu.memory_space<vmem>>, vector<1x1x512xf32>
    %41 = vector.shape_cast %40 : vector<1x1x512xf32> to vector<1x512xf32>
    %42 = vector.broadcast %41 : vector<1x512xf32> to vector<8x512xf32>
    %43 = arith.mulf %39, %42 : vector<8x512xf32>
    %44 = tpu.concatenate %8, %13, %18, %23, %3, %28, %33, %38, %43 in 0 : vector<8x512xf32>, vector<8x512xf32>, vector<8x512xf32>, vector<8x512xf32>, vector<8x512xf32>, vector<8x512xf32>, vector<8x512xf32>, vector<8x512xf32>, vector<8x512xf32> -> vector<72x512xf32>
    %45 = arith.truncf %44 : vector<72x512xf32> to vector<72x512xbf16>
    %c0_19 = arith.constant 0 : index
    %c0_20 = arith.constant 0 : index
    %46 = vector.load %arg2[%c0_19, %c0_20] : memref<8x72xbf16, #tpu.memory_space<vmem>>, vector<8x72xbf16>
    %cst = arith.constant dense<0.000000e+00> : vector<8x512xf32>
    %47 = tpu.matmul %46, %45, %cst {dimension_numbers = #tpu.dot_dimension_numbers<[1], [0], [0], [1], [0, 0, 1, 1], [], []>} : vector<8x72xbf16>, vector<72x512xbf16>, vector<8x512xf32> -> vector<8x512xf32>
    %c0_21 = arith.constant 0 : index
    %c0_22 = arith.constant 0 : index
    %48 = vector.load %arg3[%c0_21, %c0_22] : memref<8x1xf32, #tpu.memory_space<vmem>>, vector<8x1xf32>
    %49 = vector.broadcast %48 : vector<8x1xf32> to vector<8x512xf32>
    %50 = arith.addf %47, %49 : vector<8x512xf32>
    %c0_23 = arith.constant 0 : index
    %c0_24 = arith.constant 0 : index
    %51 = vector.load %arg14[%c0_23, %c0_24] : memref<8x1xf32, #tpu.memory_space<vmem>>, vector<8x1xf32>
    %cst_25 = arith.constant dense<0.000000e+00> : vector<8xf32>
    %52 = vector.multi_reduction <add>, %50, %cst_25 [1] : vector<8x512xf32> to vector<8xf32>
    %53 = vector.shape_cast %52 : vector<8xf32> to vector<8x1xf32>
    %54 = arith.addf %51, %53 : vector<8x1xf32>
    %c0_26 = arith.constant 0 : index
    %c0_27 = arith.constant 0 : index
    %55 = vector.load %arg14[%c0_26, %c0_27] : memref<8x1xf32, #tpu.memory_space<vmem>>, vector<8x1xf32>
    tpu.vector_store %arg14[%c0_26, %c0_27], %54 {strides = array<i32>} : memref<8x1xf32, #tpu.memory_space<vmem>>, vector<8x1xf32>,
    %c0_28 = arith.constant 0 : index
    %c0_29 = arith.constant 0 : index
    %56 = vector.load %arg15[%c0_28, %c0_29] : memref<8x1xf32, #tpu.memory_space<vmem>>, vector<8x1xf32>
    %57 = arith.mulf %50, %50 : vector<8x512xf32>
    %cst_30 = arith.constant dense<0.000000e+00> : vector<8xf32>
    %58 = vector.multi_reduction <add>, %57, %cst_30 [1] : vector<8x512xf32> to vector<8xf32>
    %59 = vector.shape_cast %58 : vector<8xf32> to vector<8x1xf32>
    %60 = arith.addf %56, %59 : vector<8x1xf32>
    %c0_31 = arith.constant 0 : index
    %c0_32 = arith.constant 0 : index
    %61 = vector.load %arg15[%c0_31, %c0_32] : memref<8x1xf32, #tpu.memory_space<vmem>>, vector<8x1xf32>
    tpu.vector_store %arg15[%c0_31, %c0_32], %60 {strides = array<i32>} : memref<8x1xf32, #tpu.memory_space<vmem>>, vector<8x1xf32>,
    %62 = arith.truncf %50 : vector<8x512xf32> to vector<8x512xbf16>
    %c0_33 = arith.constant 0 : index
    %c0_34 = arith.constant 0 : index
    %63 = vector.load %arg9[%c0_33, %c0_34] : memref<8x512xbf16, #tpu.memory_space<vmem>>, vector<8x512xbf16>
    tpu.vector_store %arg9[%c0_33, %c0_34], %62 {strides = array<i32>} : memref<8x512xbf16, #tpu.memory_space<vmem>>, vector<8x512xbf16>,
    %c0_i32_35 = arith.constant 0 : i32
    %64 = arith.cmpi eq, %arg0, %c0_i32_35 : i32
    %65 = arith.extui %64 : i1 to i32
    %c0_i32_36 = arith.constant 0 : i32
    %66 = arith.cmpi ne, %65, %c0_i32_36 : i32
    scf.if %66 {
      %c0_37 = arith.constant 0 : index
      %c0_38 = arith.constant 0 : index
      %67 = vector.load %arg14[%c0_37, %c0_38] : memref<8x1xf32, #tpu.memory_space<vmem>>, vector<8x1xf32>
      %c0_39 = arith.constant 0 : index
      %c0_40 = arith.constant 0 : index
      %68 = vector.load %arg10[%c0_39, %c0_40] : memref<8x1xf32, #tpu.memory_space<vmem>>, vector<8x1xf32>
      tpu.vector_store %arg10[%c0_39, %c0_40], %67 {strides = array<i32>} : memref<8x1xf32, #tpu.memory_space<vmem>>, vector<8x1xf32>,
      %c0_41 = arith.constant 0 : index
      %c0_42 = arith.constant 0 : index
      %69 = vector.load %arg15[%c0_41, %c0_42] : memref<8x1xf32, #tpu.memory_space<vmem>>, vector<8x1xf32>
      %c0_43 = arith.constant 0 : index
      %c0_44 = arith.constant 0 : index
      %70 = vector.load %arg11[%c0_43, %c0_44] : memref<8x1xf32, #tpu.memory_space<vmem>>, vector<8x1xf32>
      tpu.vector_store %arg11[%c0_43, %c0_44], %69 {strides = array<i32>} : memref<8x1xf32, #tpu.memory_space<vmem>>, vector<8x1xf32>,
    } else {
    }
    return
  }
  func.func @transform_0(%arg0: i32) -> (i32, i32) {
    %c0_i32 = arith.constant 0 : i32
    %c0_i32_0 = arith.constant 0 : i32
    return %c0_i32, %arg0 : i32, i32
  }
  func.func @transform_1(%arg0: i32) -> (i32, i32) {
    %c0_i32 = arith.constant 0 : i32
    %c0_i32_0 = arith.constant 0 : i32
    %c0_i32_1 = arith.constant 0 : i32
    return %c0_i32, %c0_i32_0 : i32, i32
  }
  func.func @transform_2(%arg0: i32) -> (i32, i32) {
    %c0_i32 = arith.constant 0 : i32
    %c0_i32_0 = arith.constant 0 : i32
    %c0_i32_1 = arith.constant 0 : i32
    return %c0_i32, %c0_i32_0 : i32, i32
  }
  func.func @transform_3(%arg0: i32) -> (i32, i32) {
    %c0_i32 = arith.constant 0 : i32
    %c0_i32_0 = arith.constant 0 : i32
    %c0_i32_1 = arith.constant 0 : i32
    return %c0_i32, %c0_i32_0 : i32, i32
  }
  func.func @transform_4(%arg0: i32) -> (i32, i32) {
    %c0_i32 = arith.constant 0 : i32
    %c0_i32_0 = arith.constant 0 : i32
    %c0_i32_1 = arith.constant 0 : i32
    return %c0_i32, %c0_i32_0 : i32, i32
  }
  func.func @transform_5(%arg0: i32) -> (i32, i32) {
    %c0_i32 = arith.constant 0 : i32
    %c0_i32_0 = arith.constant 0 : i32
    %c0_i32_1 = arith.constant 0 : i32
    return %c0_i32, %c0_i32_0 : i32, i32
  }
  func.func @transform_6(%arg0: i32) -> (i32, i32) {
    %c0_i32 = arith.constant 0 : i32
    %c0_i32_0 = arith.constant 0 : i32
    %c0_i32_1 = arith.constant 0 : i32
    return %c0_i32, %c0_i32_0 : i32, i32
  }
  func.func @transform_7(%arg0: i32) -> (i32, i32, i32) {
    %c0_i32 = arith.constant 0 : i32
    %c0_i32_0 = arith.constant 0 : i32
    %c0_i32_1 = arith.constant 0 : i32
    %c0_i32_2 = arith.constant 0 : i32
    return %c0_i32, %c0_i32_0, %c0_i32_1 : i32, i32, i32
  }
  func.func @transform_8(%arg0: i32) -> (i32, i32) {
    %c0_i32 = arith.constant 0 : i32
    %c0_i32_0 = arith.constant 0 : i32
    return %c0_i32, %arg0 : i32, i32
  }
  func.func @transform_9(%arg0: i32) -> (i32, i32) {
    %c0_i32 = arith.constant 0 : i32
    %c0_i32_0 = arith.constant 0 : i32
    %c0_i32_1 = arith.constant 0 : i32
    return %c0_i32, %c0_i32_0 : i32, i32
  }
  func.func @transform_10(%arg0: i32) -> (i32, i32) {
    %c0_i32 = arith.constant 0 : i32
    %c0_i32_0 = arith.constant 0 : i32
    %c0_i32_1 = arith.constant 0 : i32
    return %c0_i32, %c0_i32_0 : i32, i32
  }
}

module attributes {stable_mosaic.version = 11 : i64} {
  func.func @_fused_conv_kernel(%arg0: i32, %arg1: memref<8x512xbf16, #tpu.memory_space<vmem>>, %arg2: memref<8x72xbf16, #tpu.memory_space<vmem>>, %arg3: memref<8x1xf32, #tpu.memory_space<vmem>>, %arg4: memref<8x1xf32, #tpu.memory_space<vmem>>, %arg5: memref<8x1xf32, #tpu.memory_space<vmem>>, %arg6: memref<8x1xf32, #tpu.memory_space<vmem>>, %arg7: memref<8x1xf32, #tpu.memory_space<vmem>>, %arg8: memref<9x1x512xf32, #tpu.memory_space<vmem>>, %arg9: memref<8x512xbf16, #tpu.memory_space<vmem>>, %arg10: memref<8x1xf32, #tpu.memory_space<vmem>>, %arg11: memref<8x1xf32, #tpu.memory_space<vmem>>, %arg12: memref<8x1xf32, #tpu.memory_space<vmem>>, %arg13: memref<8x1xf32, #tpu.memory_space<vmem>>, %arg14: memref<8x1xf32, #tpu.memory_space<vmem>>, %arg15: memref<8x1xf32, #tpu.memory_space<vmem>>) attributes {dimension_semantics = [#tpu.dimension_semantics<arbitrary>], iteration_bounds = array<i64: 1>, scalar_prefetch = 0 : i64, scratch_operands = 4 : i64, tpu.core_type = #tpu.core_type<tc>, window_params = [{transform_indices = @transform_0, window_bounds = array<i64: 8, 512>}, {pipeline_mode = #tpu.pipeline_mode<synchronous>, transform_indices = @transform_1, window_bounds = array<i64: 8, 72>}, {pipeline_mode = #tpu.pipeline_mode<synchronous>, transform_indices = @transform_2, window_bounds = array<i64: 8, 1>}, {pipeline_mode = #tpu.pipeline_mode<synchronous>, transform_indices = @transform_3, window_bounds = array<i64: 8, 1>}, {pipeline_mode = #tpu.pipeline_mode<synchronous>, transform_indices = @transform_4, window_bounds = array<i64: 8, 1>}, {pipeline_mode = #tpu.pipeline_mode<synchronous>, transform_indices = @transform_5, window_bounds = array<i64: 8, 1>}, {pipeline_mode = #tpu.pipeline_mode<synchronous>, transform_indices = @transform_6, window_bounds = array<i64: 8, 1>}, {pipeline_mode = #tpu.pipeline_mode<synchronous>, transform_indices = @transform_7, window_bounds = array<i64: 9, 1, 512>}, {transform_indices = @transform_8, window_bounds = array<i64: 8, 512>}, {pipeline_mode = #tpu.pipeline_mode<synchronous>, transform_indices = @transform_9, window_bounds = array<i64: 8, 1>}, {pipeline_mode = #tpu.pipeline_mode<synchronous>, transform_indices = @transform_10, window_bounds = array<i64: 8, 1>}]} {
    %c0_i32 = arith.constant 0 : i32
    %0 = arith.cmpi eq, %arg0, %c0_i32 : i32
    %1 = arith.extui %0 : i1 to i32
    %c0_i32_0 = arith.constant 0 : i32
    %2 = arith.cmpi ne, %1, %c0_i32_0 : i32
    scf.if %2 {
      %cst_42 = arith.constant 0.000000e+00 : f32
      %76 = vector.broadcast %cst_42 : f32 to vector<8x1xf32>
      %c0_43 = arith.constant 0 : index
      %c0_44 = arith.constant 0 : index
      %77 = vector.load %arg14[%c0_43, %c0_44] : memref<8x1xf32, #tpu.memory_space<vmem>>, vector<8x1xf32>
      tpu.vector_store %arg14[%c0_43, %c0_44], %76 {strides = array<i32>} : memref<8x1xf32, #tpu.memory_space<vmem>>, vector<8x1xf32>,
      %cst_45 = arith.constant 0.000000e+00 : f32
      %78 = vector.broadcast %cst_45 : f32 to vector<8x1xf32>
      %c0_46 = arith.constant 0 : index
      %c0_47 = arith.constant 0 : index
      %79 = vector.load %arg15[%c0_46, %c0_47] : memref<8x1xf32, #tpu.memory_space<vmem>>, vector<8x1xf32>
      tpu.vector_store %arg15[%c0_46, %c0_47], %78 {strides = array<i32>} : memref<8x1xf32, #tpu.memory_space<vmem>>, vector<8x1xf32>,
      %c0_48 = arith.constant 0 : index
      %c0_49 = arith.constant 0 : index
      %80 = vector.load %arg6[%c0_48, %c0_49] : memref<8x1xf32, #tpu.memory_space<vmem>>, vector<8x1xf32>
      %cst_50 = arith.constant 0.001953125 : f32
      %81 = vector.broadcast %cst_50 : f32 to vector<8x1xf32>
      %82 = arith.mulf %80, %81 : vector<8x1xf32>
      %c0_51 = arith.constant 0 : index
      %c0_52 = arith.constant 0 : index
      %83 = vector.load %arg7[%c0_51, %c0_52] : memref<8x1xf32, #tpu.memory_space<vmem>>, vector<8x1xf32>
      %cst_53 = arith.constant 0.001953125 : f32
      %84 = vector.broadcast %cst_53 : f32 to vector<8x1xf32>
      %85 = arith.mulf %83, %84 : vector<8x1xf32>
      %86 = arith.mulf %82, %82 : vector<8x1xf32>
      %87 = arith.subf %85, %86 : vector<8x1xf32>
      %c0_54 = arith.constant 0 : index
      %c0_55 = arith.constant 0 : index
      %88 = vector.load %arg4[%c0_54, %c0_55] : memref<8x1xf32, #tpu.memory_space<vmem>>, vector<8x1xf32>
      %cst_56 = arith.constant 9.99999974E-6 : f32
      %89 = vector.broadcast %cst_56 : f32 to vector<8x1xf32>
      %90 = arith.addf %87, %89 : vector<8x1xf32>
      %91 = math.rsqrt %90 : vector<8x1xf32>
      %92 = arith.mulf %88, %91 : vector<8x1xf32>
      %c0_57 = arith.constant 0 : index
      %c0_58 = arith.constant 0 : index
      %93 = vector.load %arg12[%c0_57, %c0_58] : memref<8x1xf32, #tpu.memory_space<vmem>>, vector<8x1xf32>
      tpu.vector_store %arg12[%c0_57, %c0_58], %92 {strides = array<i32>} : memref<8x1xf32, #tpu.memory_space<vmem>>, vector<8x1xf32>,
      %c0_59 = arith.constant 0 : index
      %c0_60 = arith.constant 0 : index
      %94 = vector.load %arg5[%c0_59, %c0_60] : memref<8x1xf32, #tpu.memory_space<vmem>>, vector<8x1xf32>
      %c0_61 = arith.constant 0 : index
      %c0_62 = arith.constant 0 : index
      %95 = vector.load %arg12[%c0_61, %c0_62] : memref<8x1xf32, #tpu.memory_space<vmem>>, vector<8x1xf32>
      %96 = arith.mulf %82, %95 : vector<8x1xf32>
      %97 = arith.subf %94, %96 : vector<8x1xf32>
      %c0_63 = arith.constant 0 : index
      %c0_64 = arith.constant 0 : index
      %98 = vector.load %arg13[%c0_63, %c0_64] : memref<8x1xf32, #tpu.memory_space<vmem>>, vector<8x1xf32>
      tpu.vector_store %arg13[%c0_63, %c0_64], %97 {strides = array<i32>} : memref<8x1xf32, #tpu.memory_space<vmem>>, vector<8x1xf32>,
    } else {
    }
    %c0 = arith.constant 0 : index
    %c0_1 = arith.constant 0 : index
    %3 = vector.load %arg1[%c0, %c0_1] : memref<8x512xbf16, #tpu.memory_space<vmem>>, vector<8x512xbf16>
    %4 = arith.extf %3 : vector<8x512xbf16> to vector<8x512xf32>
    %c0_2 = arith.constant 0 : index
    %c0_3 = arith.constant 0 : index
    %5 = vector.load %arg12[%c0_2, %c0_3] : memref<8x1xf32, #tpu.memory_space<vmem>>, vector<8x1xf32>
    %6 = vector.broadcast %5 : vector<8x1xf32> to vector<8x512xf32>
    %7 = arith.mulf %4, %6 : vector<8x512xf32>
    %c0_4 = arith.constant 0 : index
    %c0_5 = arith.constant 0 : index
    %8 = vector.load %arg13[%c0_4, %c0_5] : memref<8x1xf32, #tpu.memory_space<vmem>>, vector<8x1xf32>
    %9 = vector.broadcast %8 : vector<8x1xf32> to vector<8x512xf32>
    %10 = arith.addf %7, %9 : vector<8x512xf32>
    %cst = arith.constant 0.000000e+00 : f32
    %11 = vector.broadcast %cst : f32 to vector<8x512xf32>
    %12 = arith.maximumf %10, %11 : vector<8x512xf32>
    %c17_i32 = arith.constant 17 : i32
    %13 = tpu.dynamic_rotate %12 by %c17_i32 dim 1 : vector<8x512xf32>, i32 -> vector<8x512xf32>
    %c0_6 = arith.constant 0 : index
    %c0_7 = arith.constant 0 : index
    %c0_8 = arith.constant 0 : index
    %14 = vector.load %arg8[%c0_6, %c0_7, %c0_8] : memref<9x1x512xf32, #tpu.memory_space<vmem>>, vector<1x1x512xf32>
    %15 = vector.shape_cast %14 : vector<1x1x512xf32> to vector<1x512xf32>
    %16 = vector.broadcast %15 : vector<1x512xf32> to vector<8x512xf32>
    %17 = arith.mulf %13, %16 : vector<8x512xf32>
    %c16_i32 = arith.constant 16 : i32
    %18 = tpu.dynamic_rotate %12 by %c16_i32 dim 1 : vector<8x512xf32>, i32 -> vector<8x512xf32>
    %c1 = arith.constant 1 : index
    %c0_9 = arith.constant 0 : index
    %c0_10 = arith.constant 0 : index
    %19 = vector.load %arg8[%c1, %c0_9, %c0_10] : memref<9x1x512xf32, #tpu.memory_space<vmem>>, vector<1x1x512xf32>
    %20 = vector.shape_cast %19 : vector<1x1x512xf32> to vector<1x512xf32>
    %21 = vector.broadcast %20 : vector<1x512xf32> to vector<8x512xf32>
    %22 = arith.mulf %18, %21 : vector<8x512xf32>
    %c15_i32 = arith.constant 15 : i32
    %23 = tpu.dynamic_rotate %12 by %c15_i32 dim 1 : vector<8x512xf32>, i32 -> vector<8x512xf32>
    %c2 = arith.constant 2 : index
    %c0_11 = arith.constant 0 : index
    %c0_12 = arith.constant 0 : index
    %24 = vector.load %arg8[%c2, %c0_11, %c0_12] : memref<9x1x512xf32, #tpu.memory_space<vmem>>, vector<1x1x512xf32>
    %25 = vector.shape_cast %24 : vector<1x1x512xf32> to vector<1x512xf32>
    %26 = vector.broadcast %25 : vector<1x512xf32> to vector<8x512xf32>
    %27 = arith.mulf %23, %26 : vector<8x512xf32>
    %c1_i32 = arith.constant 1 : i32
    %28 = tpu.dynamic_rotate %12 by %c1_i32 dim 1 : vector<8x512xf32>, i32 -> vector<8x512xf32>
    %c3 = arith.constant 3 : index
    %c0_13 = arith.constant 0 : index
    %c0_14 = arith.constant 0 : index
    %29 = vector.load %arg8[%c3, %c0_13, %c0_14] : memref<9x1x512xf32, #tpu.memory_space<vmem>>, vector<1x1x512xf32>
    %30 = vector.shape_cast %29 : vector<1x1x512xf32> to vector<1x512xf32>
    %31 = vector.broadcast %30 : vector<1x512xf32> to vector<8x512xf32>
    %32 = arith.mulf %28, %31 : vector<8x512xf32>
    %c511_i32 = arith.constant 511 : i32
    %33 = tpu.dynamic_rotate %12 by %c511_i32 dim 1 : vector<8x512xf32>, i32 -> vector<8x512xf32>
    %c5 = arith.constant 5 : index
    %c0_15 = arith.constant 0 : index
    %c0_16 = arith.constant 0 : index
    %34 = vector.load %arg8[%c5, %c0_15, %c0_16] : memref<9x1x512xf32, #tpu.memory_space<vmem>>, vector<1x1x512xf32>
    %35 = vector.shape_cast %34 : vector<1x1x512xf32> to vector<1x512xf32>
    %36 = vector.broadcast %35 : vector<1x512xf32> to vector<8x512xf32>
    %37 = arith.mulf %33, %36 : vector<8x512xf32>
    %c497_i32 = arith.constant 497 : i32
    %38 = tpu.dynamic_rotate %12 by %c497_i32 dim 1 : vector<8x512xf32>, i32 -> vector<8x512xf32>
    %c6 = arith.constant 6 : index
    %c0_17 = arith.constant 0 : index
    %c0_18 = arith.constant 0 : index
    %39 = vector.load %arg8[%c6, %c0_17, %c0_18] : memref<9x1x512xf32, #tpu.memory_space<vmem>>, vector<1x1x512xf32>
    %40 = vector.shape_cast %39 : vector<1x1x512xf32> to vector<1x512xf32>
    %41 = vector.broadcast %40 : vector<1x512xf32> to vector<8x512xf32>
    %42 = arith.mulf %38, %41 : vector<8x512xf32>
    %c496_i32 = arith.constant 496 : i32
    %43 = tpu.dynamic_rotate %12 by %c496_i32 dim 1 : vector<8x512xf32>, i32 -> vector<8x512xf32>
    %c7 = arith.constant 7 : index
    %c0_19 = arith.constant 0 : index
    %c0_20 = arith.constant 0 : index
    %44 = vector.load %arg8[%c7, %c0_19, %c0_20] : memref<9x1x512xf32, #tpu.memory_space<vmem>>, vector<1x1x512xf32>
    %45 = vector.shape_cast %44 : vector<1x1x512xf32> to vector<1x512xf32>
    %46 = vector.broadcast %45 : vector<1x512xf32> to vector<8x512xf32>
    %47 = arith.mulf %43, %46 : vector<8x512xf32>
    %c495_i32 = arith.constant 495 : i32
    %48 = tpu.dynamic_rotate %12 by %c495_i32 dim 1 : vector<8x512xf32>, i32 -> vector<8x512xf32>
    %c8 = arith.constant 8 : index
    %c0_21 = arith.constant 0 : index
    %c0_22 = arith.constant 0 : index
    %49 = vector.load %arg8[%c8, %c0_21, %c0_22] : memref<9x1x512xf32, #tpu.memory_space<vmem>>, vector<1x1x512xf32>
    %50 = vector.shape_cast %49 : vector<1x1x512xf32> to vector<1x512xf32>
    %51 = vector.broadcast %50 : vector<1x512xf32> to vector<8x512xf32>
    %52 = arith.mulf %48, %51 : vector<8x512xf32>
    %53 = tpu.concatenate %17, %22, %27, %32, %12, %37, %42, %47, %52 in 0 : vector<8x512xf32>, vector<8x512xf32>, vector<8x512xf32>, vector<8x512xf32>, vector<8x512xf32>, vector<8x512xf32>, vector<8x512xf32>, vector<8x512xf32>, vector<8x512xf32> -> vector<72x512xf32>
    %54 = arith.truncf %53 : vector<72x512xf32> to vector<72x512xbf16>
    %c0_23 = arith.constant 0 : index
    %c0_24 = arith.constant 0 : index
    %55 = vector.load %arg2[%c0_23, %c0_24] : memref<8x72xbf16, #tpu.memory_space<vmem>>, vector<8x72xbf16>
    %cst_25 = arith.constant dense<0.000000e+00> : vector<8x512xf32>
    %56 = tpu.matmul %55, %54, %cst_25 {dimension_numbers = #tpu.dot_dimension_numbers<[1], [0], [0], [1], [0, 0, 1, 1], [], []>} : vector<8x72xbf16>, vector<72x512xbf16>, vector<8x512xf32> -> vector<8x512xf32>
    %c0_26 = arith.constant 0 : index
    %c0_27 = arith.constant 0 : index
    %57 = vector.load %arg3[%c0_26, %c0_27] : memref<8x1xf32, #tpu.memory_space<vmem>>, vector<8x1xf32>
    %58 = vector.broadcast %57 : vector<8x1xf32> to vector<8x512xf32>
    %59 = arith.addf %56, %58 : vector<8x512xf32>
    %c0_28 = arith.constant 0 : index
    %c0_29 = arith.constant 0 : index
    %60 = vector.load %arg14[%c0_28, %c0_29] : memref<8x1xf32, #tpu.memory_space<vmem>>, vector<8x1xf32>
    %cst_30 = arith.constant dense<0.000000e+00> : vector<8xf32>
    %61 = vector.multi_reduction <add>, %59, %cst_30 [1] : vector<8x512xf32> to vector<8xf32>
    %62 = vector.shape_cast %61 : vector<8xf32> to vector<8x1xf32>
    %63 = arith.addf %60, %62 : vector<8x1xf32>
    %c0_31 = arith.constant 0 : index
    %c0_32 = arith.constant 0 : index
    %64 = vector.load %arg14[%c0_31, %c0_32] : memref<8x1xf32, #tpu.memory_space<vmem>>, vector<8x1xf32>
    tpu.vector_store %arg14[%c0_31, %c0_32], %63 {strides = array<i32>} : memref<8x1xf32, #tpu.memory_space<vmem>>, vector<8x1xf32>,
    %c0_33 = arith.constant 0 : index
    %c0_34 = arith.constant 0 : index
    %65 = vector.load %arg15[%c0_33, %c0_34] : memref<8x1xf32, #tpu.memory_space<vmem>>, vector<8x1xf32>
    %66 = arith.mulf %59, %59 : vector<8x512xf32>
    %cst_35 = arith.constant dense<0.000000e+00> : vector<8xf32>
    %67 = vector.multi_reduction <add>, %66, %cst_35 [1] : vector<8x512xf32> to vector<8xf32>
    %68 = vector.shape_cast %67 : vector<8xf32> to vector<8x1xf32>
    %69 = arith.addf %65, %68 : vector<8x1xf32>
    %c0_36 = arith.constant 0 : index
    %c0_37 = arith.constant 0 : index
    %70 = vector.load %arg15[%c0_36, %c0_37] : memref<8x1xf32, #tpu.memory_space<vmem>>, vector<8x1xf32>
    tpu.vector_store %arg15[%c0_36, %c0_37], %69 {strides = array<i32>} : memref<8x1xf32, #tpu.memory_space<vmem>>, vector<8x1xf32>,
    %71 = arith.truncf %59 : vector<8x512xf32> to vector<8x512xbf16>
    %c0_38 = arith.constant 0 : index
    %c0_39 = arith.constant 0 : index
    %72 = vector.load %arg9[%c0_38, %c0_39] : memref<8x512xbf16, #tpu.memory_space<vmem>>, vector<8x512xbf16>
    tpu.vector_store %arg9[%c0_38, %c0_39], %71 {strides = array<i32>} : memref<8x512xbf16, #tpu.memory_space<vmem>>, vector<8x512xbf16>,
    %c0_i32_40 = arith.constant 0 : i32
    %73 = arith.cmpi eq, %arg0, %c0_i32_40 : i32
    %74 = arith.extui %73 : i1 to i32
    %c0_i32_41 = arith.constant 0 : i32
    %75 = arith.cmpi ne, %74, %c0_i32_41 : i32
    scf.if %75 {
      %c0_42 = arith.constant 0 : index
      %c0_43 = arith.constant 0 : index
      %76 = vector.load %arg14[%c0_42, %c0_43] : memref<8x1xf32, #tpu.memory_space<vmem>>, vector<8x1xf32>
      %c0_44 = arith.constant 0 : index
      %c0_45 = arith.constant 0 : index
      %77 = vector.load %arg10[%c0_44, %c0_45] : memref<8x1xf32, #tpu.memory_space<vmem>>, vector<8x1xf32>
      tpu.vector_store %arg10[%c0_44, %c0_45], %76 {strides = array<i32>} : memref<8x1xf32, #tpu.memory_space<vmem>>, vector<8x1xf32>,
      %c0_46 = arith.constant 0 : index
      %c0_47 = arith.constant 0 : index
      %78 = vector.load %arg15[%c0_46, %c0_47] : memref<8x1xf32, #tpu.memory_space<vmem>>, vector<8x1xf32>
      %c0_48 = arith.constant 0 : index
      %c0_49 = arith.constant 0 : index
      %79 = vector.load %arg11[%c0_48, %c0_49] : memref<8x1xf32, #tpu.memory_space<vmem>>, vector<8x1xf32>
      tpu.vector_store %arg11[%c0_48, %c0_49], %78 {strides = array<i32>} : memref<8x1xf32, #tpu.memory_space<vmem>>, vector<8x1xf32>,
    } else {
    }
    return
  }
  func.func @transform_0(%arg0: i32) -> (i32, i32) {
    %c0_i32 = arith.constant 0 : i32
    %c0_i32_0 = arith.constant 0 : i32
    return %c0_i32, %arg0 : i32, i32
  }
  func.func @transform_1(%arg0: i32) -> (i32, i32) {
    %c0_i32 = arith.constant 0 : i32
    %c0_i32_0 = arith.constant 0 : i32
    %c0_i32_1 = arith.constant 0 : i32
    return %c0_i32, %c0_i32_0 : i32, i32
  }
  func.func @transform_2(%arg0: i32) -> (i32, i32) {
    %c0_i32 = arith.constant 0 : i32
    %c0_i32_0 = arith.constant 0 : i32
    %c0_i32_1 = arith.constant 0 : i32
    return %c0_i32, %c0_i32_0 : i32, i32
  }
  func.func @transform_3(%arg0: i32) -> (i32, i32) {
    %c0_i32 = arith.constant 0 : i32
    %c0_i32_0 = arith.constant 0 : i32
    %c0_i32_1 = arith.constant 0 : i32
    return %c0_i32, %c0_i32_0 : i32, i32
  }
  func.func @transform_4(%arg0: i32) -> (i32, i32) {
    %c0_i32 = arith.constant 0 : i32
    %c0_i32_0 = arith.constant 0 : i32
    %c0_i32_1 = arith.constant 0 : i32
    return %c0_i32, %c0_i32_0 : i32, i32
  }
  func.func @transform_5(%arg0: i32) -> (i32, i32) {
    %c0_i32 = arith.constant 0 : i32
    %c0_i32_0 = arith.constant 0 : i32
    %c0_i32_1 = arith.constant 0 : i32
    return %c0_i32, %c0_i32_0 : i32, i32
  }
  func.func @transform_6(%arg0: i32) -> (i32, i32) {
    %c0_i32 = arith.constant 0 : i32
    %c0_i32_0 = arith.constant 0 : i32
    %c0_i32_1 = arith.constant 0 : i32
    return %c0_i32, %c0_i32_0 : i32, i32
  }
  func.func @transform_7(%arg0: i32) -> (i32, i32, i32) {
    %c0_i32 = arith.constant 0 : i32
    %c0_i32_0 = arith.constant 0 : i32
    %c0_i32_1 = arith.constant 0 : i32
    %c0_i32_2 = arith.constant 0 : i32
    return %c0_i32, %c0_i32_0, %c0_i32_1 : i32, i32, i32
  }
  func.func @transform_8(%arg0: i32) -> (i32, i32) {
    %c0_i32 = arith.constant 0 : i32
    %c0_i32_0 = arith.constant 0 : i32
    return %c0_i32, %arg0 : i32, i32
  }
  func.func @transform_9(%arg0: i32) -> (i32, i32) {
    %c0_i32 = arith.constant 0 : i32
    %c0_i32_0 = arith.constant 0 : i32
    %c0_i32_1 = arith.constant 0 : i32
    return %c0_i32, %c0_i32_0 : i32, i32
  }
  func.func @transform_10(%arg0: i32) -> (i32, i32) {
    %c0_i32 = arith.constant 0 : i32
    %c0_i32_0 = arith.constant 0 : i32
    %c0_i32_1 = arith.constant 0 : i32
    return %c0_i32, %c0_i32_0 : i32, i32
  }
}

</mosaic_0001>

<llo_original>
// kernel: cov_forward.5
$region0: #{cov_forward.5}
  #allocation0 [shape = 'u32[]', space=smem, size = 0x4, offset = 0x4, fixed_abs, tag = 'smem constant byte address 0x4 - core index']
  #allocation1 [shape = 'u32[144,128]{1,0:T(1,128)}', space=vmem, size = 0x12000, scoped, tag = 'internal scratch']
  %s0 = inlined_call_operand.vmem [shape: bf16[8,512], index: 0, kind: input, shape index: {}]
  %s1 = inlined_call_operand.vmem [shape: f32[8,1], index: 1, kind: input, shape index: {}]
  %s2 = inlined_call_operand.vmem [shape: f32[8,1], index: 2, kind: input, shape index: {}]
  %s3 = inlined_call_operand.vmem [shape: f32[8,1], index: 3, kind: input, shape index: {}]
  %s4 = inlined_call_operand.vmem [shape: f32[8,1], index: 4, kind: input, shape index: {}]
  %s5 = inlined_call_operand.vmem [shape: f32[8,512], index: 5, kind: output, shape index: {}]
  %s6 = sld [smem:[#allocation0]]
  $region30: #{cov_forward.5} parent=0
    _
  %s8 = ssub.s32 1, %s6
  %s9 = scalar_select 0, %s8, %s6
  // Predicated region
  $region2: #{cov_forward.5} parent=0 // pred_check
    _
  $region3: #{cov_forward.5} parent=0 // pred_check_branch
    %11 = sbr.rel (0) target = $region5
  $region4: #{cov_forward.5} parent=0 // pred_region
    _
  $region5: #{cov_forward.5} parent=0 // pred_fallthru
    _
  // Predicated region
  $region6: #{cov_forward.5} parent=0 // pred_check
    _
  $region7: #{cov_forward.5} parent=0 // pred_check_branch
    %13 = sbr.rel (0) target = $region9
  $region8: #{cov_forward.5} parent=0 // pred_region
    _
  $region9: #{cov_forward.5} parent=0 // pred_fallthru
    _
  // Predicated region
  $region10: #{cov_forward.5} parent=0 // pred_check
    _
  $region11: #{cov_forward.5} parent=0 // pred_check_branch
    %15 = sbr.rel (0) target = $region13
  $region12: #{cov_forward.5} parent=0 // pred_region
    _
  $region13: #{cov_forward.5} parent=0 // pred_fallthru
    _
  // Predicated region
  $region14: #{cov_forward.5} parent=0 // pred_check
    _
  $region15: #{cov_forward.5} parent=0 // pred_check_branch
    %17 = sbr.rel (0) target = $region17
  $region16: #{cov_forward.5} parent=0 // pred_region
    _
  $region17: #{cov_forward.5} parent=0 // pred_fallthru
    _
  // Predicated region
  $region18: #{cov_forward.5} parent=0 // pred_check
    _
  $region19: #{cov_forward.5} parent=0 // pred_check_branch
    %19 = sbr.rel (0) target = $region21
  $region20: #{cov_forward.5} parent=0 // pred_region
    _
  $region21: #{cov_forward.5} parent=0 // pred_fallthru
    _
  %v20 = vld [vmem:[%s3] sm:$0xff]
  %v21 = vmul.f32 %v20, 0.001953125
  %v22 = vld [vmem:[%s4] sm:$0xff]
  %v23 = vmul.f32 %v22, 0.001953125
  %v24 = vmul.f32 %v21, %v21
  %v25 = vsub.f32 %v23, %v24
  %v26 = vld [vmem:[%s1] sm:$0xff]
  %v27 = vadd.f32 %v25, 1e-05
  %v28 = vrsqrt.pop %v27
  %v29 = vmul.f32 %v26, %v28
  %v30 = vld [vmem:[%s2] sm:$0xff]
  %v31 = vmul.f32 %v21, %v29
  %v32 = vsub.f32 %v30, %v31
  %v33 = vld [vmem:[%s0] sm:$0xff]
  %v34 = vld [vmem:[%s0 + $0x8] sm:$0xff]
  %v35 = vunpack.c.l.bf16 %v33
  %v36 = vunpack.c.h.bf16 %v33
  %v37 = vunpack.c.l.bf16 %v34
  %v38 = vunpack.c.h.bf16 %v34
  %40 = vset.pattern.permute.xlu0 0
  %41 = vperm.xlu0 %40, %v29
  %v42 = vpop.permute.xlu0 %41
  %v44 = vmul.f32 %v35, %v42
  %v45 = vmul.f32 %v36, %v42
  %v46 = vmul.f32 %v37, %v42
  %v47 = vmul.f32 %v38, %v42
  %49 = vset.pattern.permute.xlu0 0
  %50 = vperm.xlu0 %49, %v32
  %v51 = vpop.permute.xlu0 %50
  %v53 = vadd.f32 %v44, %v51
  %v54 = vadd.f32 %v45, %v51
  %v55 = vadd.f32 %v46, %v51
  %v56 = vadd.f32 %v47, %v51
  %v57 = vmax.f32 %v53, 0.0
  %v58 = vmax.f32 %v54, 0.0
  %v59 = vmax.f32 %v55, 0.0
  %v60 = vmax.f32 %v56, 0.0
  %61 = vst [vmem:[%s5] sm:$0xff] %v57
  %62 = vst [vmem:[%s5 + $0x8] sm:$0xff] %v58
  %63 = vst [vmem:[%s5 + $0x10] sm:$0xff] %v59
  %64 = vst [vmem:[%s5 + $0x18] sm:$0xff] %v60
  // Predicated region
  $region22: #{cov_forward.5} parent=0 // pred_check
    _
  $region23: #{cov_forward.5} parent=0 // pred_check_branch
    %66 = sbr.rel (0) target = $region25
  $region24: #{cov_forward.5} parent=0 // pred_region
    _
  $region25: #{cov_forward.5} parent=0 // pred_fallthru
    _
  // Predicated region
  $region26: #{cov_forward.5} parent=0 // pred_check
    _
  $region27: #{cov_forward.5} parent=0 // pred_check_branch
    %68 = sbr.rel (0) target = $region29
  $region28: #{cov_forward.5} parent=0 // pred_region
    _
  $region29: #{cov_forward.5} parent=0 // pred_fallthru
    _

// kernel: cov_forward.4
$region0: #{cov_forward.4}
  #allocation0 [shape = 'u32[]', space=smem, size = 0x4, offset = 0x4, fixed_abs, tag = 'smem constant byte address 0x4 - core index']
  #allocation1 [shape = 'u32[144,128]{1,0:T(1,128)}', space=vmem, size = 0x12000, scoped, tag = 'internal scratch']
  #allocation2 [shape = 'f32[8,1]{1,0:T(8,128)}', space=vmem, size = 0x1000, scoped, tag = 'scratch operand']
  #allocation3 [shape = 'f32[8,1]{1,0:T(8,128)}', space=vmem, size = 0x1000, scoped, tag = 'scratch operand']
  #allocation4 [shape = 'f32[8,1]{1,0:T(8,128)}', space=vmem, size = 0x1000, scoped, tag = 'scratch operand']
  #allocation5 [shape = 'f32[8,1]{1,0:T(8,128)}', space=vmem, size = 0x1000, scoped, tag = 'scratch operand']
  %s0 = inlined_call_operand.vmem [shape: bf16[8,512], index: 0, kind: input, shape index: {}]
  %s1 = inlined_call_operand.vmem [shape: bf16[8,72], index: 1, kind: input, shape index: {}]
  %s2 = inlined_call_operand.vmem [shape: f32[8,1], index: 2, kind: input, shape index: {}]
  %s3 = inlined_call_operand.vmem [shape: f32[8,1], index: 3, kind: input, shape index: {}]
  %s4 = inlined_call_operand.vmem [shape: f32[8,1], index: 4, kind: input, shape index: {}]
  %s5 = inlined_call_operand.vmem [shape: f32[8,1], index: 5, kind: input, shape index: {}]
  %s6 = inlined_call_operand.vmem [shape: f32[8,1], index: 6, kind: input, shape index: {}]
  %s7 = inlined_call_operand.vmem [shape: f32[9,1,512], index: 7, kind: input, shape index: {}]
  %s8 = inlined_call_operand.vmem [shape: bf16[8,512], index: 8, kind: output, shape index: {0}]
  %s9 = inlined_call_operand.vmem [shape: f32[8,1], index: 9, kind: output, shape index: {1}]
  %s10 = inlined_call_operand.vmem [shape: f32[8,1], index: 10, kind: output, shape index: {2}]
  %11 = xla_tuple %s8, %s9, %s10
  %s12 = sld [smem:[#allocation0]]
  $region66: #{cov_forward.4} parent=0
    _
  %s14 = ssub.s32 1, %s12
  %s15 = scalar_select 0, %s14, %s12
  // Predicated region
  $region2: #{cov_forward.4} parent=0 // pred_check
    _
  $region3: #{cov_forward.4} parent=0 // pred_check_branch
    %17 = sbr.rel (0) target = $region5
  $region4: #{cov_forward.4} parent=0 // pred_region
    _
  $region5: #{cov_forward.4} parent=0 // pred_fallthru
    _
  // Predicated region
  $region6: #{cov_forward.4} parent=0 // pred_check
    _
  $region7: #{cov_forward.4} parent=0 // pred_check_branch
    %19 = sbr.rel (0) target = $region9
  $region8: #{cov_forward.4} parent=0 // pred_region
    _
  $region9: #{cov_forward.4} parent=0 // pred_fallthru
    _
  // Predicated region
  $region10: #{cov_forward.4} parent=0 // pred_check
    _
  $region11: #{cov_forward.4} parent=0 // pred_check_branch
    %21 = sbr.rel (0) target = $region13
  $region12: #{cov_forward.4} parent=0 // pred_region
    _
  $region13: #{cov_forward.4} parent=0 // pred_fallthru
    _
  // Predicated region
  $region14: #{cov_forward.4} parent=0 // pred_check
    _
  $region15: #{cov_forward.4} parent=0 // pred_check_branch
    %23 = sbr.rel (0) target = $region17
  $region16: #{cov_forward.4} parent=0 // pred_region
    _
  $region17: #{cov_forward.4} parent=0 // pred_fallthru
    _
  // Predicated region
  $region18: #{cov_forward.4} parent=0 // pred_check
    _
  $region19: #{cov_forward.4} parent=0 // pred_check_branch
    %25 = sbr.rel (0) target = $region21
  $region20: #{cov_forward.4} parent=0 // pred_region
    _
  $region21: #{cov_forward.4} parent=0 // pred_fallthru
    _
  // Predicated region
  $region22: #{cov_forward.4} parent=0 // pred_check
    _
  $region23: #{cov_forward.4} parent=0 // pred_check_branch
    %27 = sbr.rel (0) target = $region25
  $region24: #{cov_forward.4} parent=0 // pred_region
    _
  $region25: #{cov_forward.4} parent=0 // pred_fallthru
    _
  // Predicated region
  $region26: #{cov_forward.4} parent=0 // pred_check
    _
  $region27: #{cov_forward.4} parent=0 // pred_check_branch
    %29 = sbr.rel (0) target = $region29
  $region28: #{cov_forward.4} parent=0 // pred_region
    _
  $region29: #{cov_forward.4} parent=0 // pred_fallthru
    _
  // Predicated region
  $region30: #{cov_forward.4} parent=0 // pred_check
    _
  $region31: #{cov_forward.4} parent=0 // pred_check_branch
    %31 = sbr.rel (0) target = $region33
  $region32: #{cov_forward.4} parent=0 // pred_region
    _
  $region33: #{cov_forward.4} parent=0 // pred_fallthru
    _
  %p33 = scmp.eq.s32.totalorder 0, 0
  // Predicated region
  $region34: #{cov_forward.4} parent=0 // pred_check
    %p34 = pneg %p33
  $region35: #{cov_forward.4} parent=0 // pred_check_branch
    %36 = sbr.rel (%p34) target = $region37
  $region36: #{cov_forward.4} parent=0 // pred_region
    %vm37 = vcmask 7168
    %38 = vst.msk [vmem:[#allocation4] sm:$0xff] %vm37, 0.0
    %39 = vst.msk [vmem:[#allocation5] sm:$0xff] %vm37, 0.0
    %v40 = vld [vmem:[%s5] sm:$0xff]
    %v41 = vmul.f32 %v40, 0.001953125
    %v42 = vld [vmem:[%s6] sm:$0xff]
    %v43 = vmul.f32 %v42, 0.001953125
    %v44 = vmul.f32 %v41, %v41
    %v45 = vsub.f32 %v43, %v44
    %v46 = vld [vmem:[%s3] sm:$0xff]
    %v47 = vadd.f32 %v45, 1e-05
    %v48 = vrsqrt.pop %v47
    %v49 = vmul.f32 %v46, %v48
    %50 = vst.msk [vmem:[#allocation2] sm:$0xff] %vm37, %v49
    %v51 = vld [vmem:[%s4] sm:$0xff]
    %v52 = vld [vmem:[#allocation2] sm:$0xff]
    %v53 = vmul.f32 %v41, %v52
    %v54 = vsub.f32 %v51, %v53
    %55 = vst.msk [vmem:[#allocation3] sm:$0xff] %vm37, %v54
  $region37: #{cov_forward.4} parent=0 // pred_fallthru
    _
  %v56 = vld [vmem:[%s0] sm:$0xff]
  %v57 = vld [vmem:[%s0 + $0x8] sm:$0xff]
  %v58 = vunpack.c.l.bf16 %v56
  %v59 = vunpack.c.h.bf16 %v56
  %v60 = vunpack.c.l.bf16 %v57
  %v61 = vunpack.c.h.bf16 %v57
  %v62 = vld [vmem:[#allocation2] sm:$0xff]
  %64 = vset.pattern.permute.xlu0 0
  %65 = vperm.xlu0 %64, %v62
  %v66 = vpop.permute.xlu0 %65
  %v68 = vmul.f32 %v58, %v66
  %v69 = vmul.f32 %v59, %v66
  %v70 = vmul.f32 %v60, %v66
  %v71 = vmul.f32 %v61, %v66
  %v72 = vld [vmem:[#allocation3] sm:$0xff]
  %74 = vset.pattern.permute.xlu0 0
  %75 = vperm.xlu0 %74, %v72
  %v76 = vpop.permute.xlu0 %75
  %v78 = vadd.f32 %v68, %v76
  %v79 = vadd.f32 %v69, %v76
  %v80 = vadd.f32 %v70, %v76
  %v81 = vadd.f32 %v71, %v76
  %v82 = vmax.f32 %v78, 0.0
  %v83 = vmax.f32 %v79, 0.0
  %v84 = vmax.f32 %v80, 0.0
  %v85 = vmax.f32 %v81, 0.0
  %86 = vrot.lane.b32.xlu0 %v82, 17
  %v87 = vpop.permute.xlu0 %86
  %88 = vrot.lane.b32.xlu0 %v83, 17
  %v89 = vpop.permute.xlu0 %88
  %90 = vrot.lane.b32.xlu0 %v84, 17
  %v91 = vpop.permute.xlu0 %90
  %92 = vrot.lane.b32.xlu0 %v85, 17
  %v93 = vpop.permute.xlu0 %92
  %v94 = vlaneseq
  %v95 = vand.u32 %v94, 127
  %vm96 = vcmp.lt.s32.totalorder %v95, 17
  %v97 = vsel %vm96, %v91, %v93
  %v98 = vsel %vm96, %v89, %v91
  %v99 = vsel %vm96, %v87, %v89
  %v100 = vsel %vm96, %v93, %v87
  %v101 = vld [vmem:[%s7] sm:$0xf]
  %v103 = vlaneseq
  %v104 = vshrl.u32 %v103, 7
  %v105 = vsub.s32 0, %v104
  %v106 = vrot.slane %v101, %v105
  %v107 = vlaneseq
  %v108 = vshrl.u32 %v107, 7
  %v109 = vsub.s32 1, %v108
  %v110 = vrot.slane %v101, %v109
  %v111 = vlaneseq
  %v112 = vshrl.u32 %v111, 7
  %v113 = vsub.s32 2, %v112
  %v114 = vrot.slane %v101, %v113
  %v115 = vlaneseq
  %v116 = vshrl.u32 %v115, 7
  %v117 = vsub.s32 3, %v116
  %v118 = vrot.slane %v101, %v117
  %v123 = vmul.f32 %v100, %v106
  %v124 = vmul.f32 %v99, %v110
  %v125 = vmul.f32 %v98, %v114
  %v126 = vmul.f32 %v97, %v118
  %127 = vrot.lane.b32.xlu0 %v82, 16
  %v128 = vpop.permute.xlu0 %127
  %129 = vrot.lane.b32.xlu0 %v83, 16
  %v130 = vpop.permute.xlu0 %129
  %131 = vrot.lane.b32.xlu0 %v84, 16
  %v132 = vpop.permute.xlu0 %131
  %133 = vrot.lane.b32.xlu0 %v85, 16
  %v134 = vpop.permute.xlu0 %133
  %vm135 = vcmp.lt.s32.totalorder %v95, 16
  %v136 = vsel %vm135, %v132, %v134
  %v137 = vsel %vm135, %v130, %v132
  %v138 = vsel %vm135, %v128, %v130
  %v139 = vsel %vm135, %v134, %v128
  %s140 = scalar_lea.vmem %s7, 4
  %v141 = vld [vmem:[%s140] sm:$0xf]
  %v143 = vlaneseq
  %v144 = vshrl.u32 %v143, 7
  %v145 = vsub.s32 0, %v144
  %v146 = vrot.slane %v141, %v145
  %v147 = vlaneseq
  %v148 = vshrl.u32 %v147, 7
  %v149 = vsub.s32 1, %v148
  %v150 = vrot.slane %v141, %v149
  %v151 = vlaneseq
  %v152 = vshrl.u32 %v151, 7
  %v153 = vsub.s32 2, %v152
  %v154 = vrot.slane %v141, %v153
  %v155 = vlaneseq
  %v156 = vshrl.u32 %v155, 7
  %v157 = vsub.s32 3, %v156
  %v158 = vrot.slane %v141, %v157
  %v163 = vmul.f32 %v139, %v146
  %v164 = vmul.f32 %v138, %v150
  %v165 = vmul.f32 %v137, %v154
  %v166 = vmul.f32 %v136, %v158
  %167 = vrot.lane.b32.xlu0 %v82, 15
  %v168 = vpop.permute.xlu0 %167
  %169 = vrot.lane.b32.xlu0 %v83, 15
  %v170 = vpop.permute.xlu0 %169
  %171 = vrot.lane.b32.xlu0 %v84, 15
  %v172 = vpop.permute.xlu0 %171
  %173 = vrot.lane.b32.xlu0 %v85, 15
  %v174 = vpop.permute.xlu0 %173
  %vm175 = vcmp.lt.s32.totalorder %v95, 15
  %v176 = vsel %vm175, %v172, %v174
  %v177 = vsel %vm175, %v170, %v172
  %v178 = vsel %vm175, %v168, %v170
  %v179 = vsel %vm175, %v174, %v168
  %s180 = scalar_lea.vmem %s7, 8
  %v181 = vld [vmem:[%s180] sm:$0xf]
  %v183 = vlaneseq
  %v184 = vshrl.u32 %v183, 7
  %v185 = vsub.s32 0, %v184
  %v186 = vrot.slane %v181, %v185
  %v187 = vlaneseq
  %v188 = vshrl.u32 %v187, 7
  %v189 = vsub.s32 1, %v188
  %v190 = vrot.slane %v181, %v189
  %v191 = vlaneseq
  %v192 = vshrl.u32 %v191, 7
  %v193 = vsub.s32 2, %v192
  %v194 = vrot.slane %v181, %v193
  %v195 = vlaneseq
  %v196 = vshrl.u32 %v195, 7
  %v197 = vsub.s32 3, %v196
  %v198 = vrot.slane %v181, %v197
  %v203 = vmul.f32 %v179, %v186
  %v204 = vmul.f32 %v178, %v190
  %v205 = vmul.f32 %v177, %v194
  %v206 = vmul.f32 %v176, %v198
  %207 = vrot.lane.b32.xlu0 %v82, 1
  %v208 = vpop.permute.xlu0 %207
  %209 = vrot.lane.b32.xlu0 %v83, 1
  %v210 = vpop.permute.xlu0 %209
  %211 = vrot.lane.b32.xlu0 %v84, 1
  %v212 = vpop.permute.xlu0 %211
  %213 = vrot.lane.b32.xlu0 %v85, 1
  %v214 = vpop.permute.xlu0 %213
  %vm215 = vcmp.lt.s32.totalorder %v95, 1
  %v216 = vsel %vm215, %v212, %v214
  %v217 = vsel %vm215, %v210, %v212
  %v218 = vsel %vm215, %v208, %v210
  %v219 = vsel %vm215, %v214, %v208
  %s220 = scalar_lea.vmem %s7, 12
  %v221 = vld [vmem:[%s220] sm:$0xf]
  %v223 = vlaneseq
  %v224 = vshrl.u32 %v223, 7
  %v225 = vsub.s32 0, %v224
  %v226 = vrot.slane %v221, %v225
  %v227 = vlaneseq
  %v228 = vshrl.u32 %v227, 7
  %v229 = vsub.s32 1, %v228
  %v230 = vrot.slane %v221, %v229
  %v231 = vlaneseq
  %v232 = vshrl.u32 %v231, 7
  %v233 = vsub.s32 2, %v232
  %v234 = vrot.slane %v221, %v233
  %v235 = vlaneseq
  %v236 = vshrl.u32 %v235, 7
  %v237 = vsub.s32 3, %v236
  %v238 = vrot.slane %v221, %v237
  %v243 = vmul.f32 %v219, %v226
  %v244 = vmul.f32 %v218, %v230
  %v245 = vmul.f32 %v217, %v234
  %v246 = vmul.f32 %v216, %v238
  %247 = vrot.lane.b32.xlu0 %v82, 127
  %v248 = vpop.permute.xlu0 %247
  %249 = vrot.lane.b32.xlu0 %v83, 127
  %v250 = vpop.permute.xlu0 %249
  %251 = vrot.lane.b32.xlu0 %v84, 127
  %v252 = vpop.permute.xlu0 %251
  %253 = vrot.lane.b32.xlu0 %v85, 127
  %v254 = vpop.permute.xlu0 %253
  %vm255 = vcmp.lt.s32.totalorder %v95, 127
  %v256 = vsel %vm255, %v252, %v254
  %v257 = vsel %vm255, %v250, %v252
  %v258 = vsel %vm255, %v248, %v250
  %v259 = vsel %vm255, %v254, %v248
  %s260 = scalar_lea.vmem %s7, 20
  %v261 = vld [vmem:[%s260] sm:$0xf]
  %v263 = vlaneseq
  %v264 = vshrl.u32 %v263, 7
  %v265 = vsub.s32 0, %v264
  %v266 = vrot.slane %v261, %v265
  %v267 = vlaneseq
  %v268 = vshrl.u32 %v267, 7
  %v269 = vsub.s32 1, %v268
  %v270 = vrot.slane %v261, %v269
  %v271 = vlaneseq
  %v272 = vshrl.u32 %v271, 7
  %v273 = vsub.s32 2, %v272
  %v274 = vrot.slane %v261, %v273
  %v275 = vlaneseq
  %v276 = vshrl.u32 %v275, 7
  %v277 = vsub.s32 3, %v276
  %v278 = vrot.slane %v261, %v277
  %v283 = vmul.f32 %v258, %v266
  %v284 = vmul.f32 %v257, %v270
  %v285 = vmul.f32 %v256, %v274
  %v286 = vmul.f32 %v259, %v278
  %287 = vrot.lane.b32.xlu0 %v82, 113
  %v288 = vpop.permute.xlu0 %287
  %289 = vrot.lane.b32.xlu0 %v83, 113
  %v290 = vpop.permute.xlu0 %289
  %291 = vrot.lane.b32.xlu0 %v84, 113
  %v292 = vpop.permute.xlu0 %291
  %293 = vrot.lane.b32.xlu0 %v85, 113
  %v294 = vpop.permute.xlu0 %293
  %vm295 = vcmp.lt.s32.totalorder %v95, 113
  %v296 = vsel %vm295, %v292, %v294
  %v297 = vsel %vm295, %v290, %v292
  %v298 = vsel %vm295, %v288, %v290
  %v299 = vsel %vm295, %v294, %v288
  %s300 = scalar_lea.vmem %s7, 24
  %v301 = vld [vmem:[%s300] sm:$0xf]
  %v303 = vlaneseq
  %v304 = vshrl.u32 %v303, 7
  %v305 = vsub.s32 0, %v304
  %v306 = vrot.slane %v301, %v305
  %v307 = vlaneseq
  %v308 = vshrl.u32 %v307, 7
  %v309 = vsub.s32 1, %v308
  %v310 = vrot.slane %v301, %v309
  %v311 = vlaneseq
  %v312 = vshrl.u32 %v311, 7
  %v313 = vsub.s32 2, %v312
  %v314 = vrot.slane %v301, %v313
  %v315 = vlaneseq
  %v316 = vshrl.u32 %v315, 7
  %v317 = vsub.s32 3, %v316
  %v318 = vrot.slane %v301, %v317
  %v323 = vmul.f32 %v298, %v306
  %v324 = vmul.f32 %v297, %v310
  %v325 = vmul.f32 %v296, %v314
  %v326 = vmul.f32 %v299, %v318
  %327 = vrot.lane.b32.xlu0 %v82, 112
  %v328 = vpop.permute.xlu0 %327
  %329 = vrot.lane.b32.xlu0 %v83, 112
  %v330 = vpop.permute.xlu0 %329
  %331 = vrot.lane.b32.xlu0 %v84, 112
  %v332 = vpop.permute.xlu0 %331
  %333 = vrot.lane.b32.xlu0 %v85, 112
  %v334 = vpop.permute.xlu0 %333
  %vm335 = vcmp.lt.s32.totalorder %v95, 112
  %v336 = vsel %vm335, %v332, %v334
  %v337 = vsel %vm335, %v330, %v332
  %v338 = vsel %vm335, %v328, %v330
  %v339 = vsel %vm335, %v334, %v328
  %s340 = scalar_lea.vmem %s7, 28
  %v341 = vld [vmem:[%s340] sm:$0xf]
  %v343 = vlaneseq
  %v344 = vshrl.u32 %v343, 7
  %v345 = vsub.s32 0, %v344
  %v346 = vrot.slane %v341, %v345
  %v347 = vlaneseq
  %v348 = vshrl.u32 %v347, 7
  %v349 = vsub.s32 1, %v348
  %v350 = vrot.slane %v341, %v349
  %v351 = vlaneseq
  %v352 = vshrl.u32 %v351, 7
  %v353 = vsub.s32 2, %v352
  %v354 = vrot.slane %v341, %v353
  %v355 = vlaneseq
  %v356 = vshrl.u32 %v355, 7
  %v357 = vsub.s32 3, %v356
  %v358 = vrot.slane %v341, %v357
  %v363 = vmul.f32 %v338, %v346
  %v364 = vmul.f32 %v337, %v350
  %v365 = vmul.f32 %v336, %v354
  %v366 = vmul.f32 %v339, %v358
  %367 = vrot.lane.b32.xlu0 %v82, 111
  %v368 = vpop.permute.xlu0 %367
  %369 = vrot.lane.b32.xlu0 %v83, 111
  %v370 = vpop.permute.xlu0 %369
  %371 = vrot.lane.b32.xlu0 %v84, 111
  %v372 = vpop.permute.xlu0 %371
  %373 = vrot.lane.b32.xlu0 %v85, 111
  %v374 = vpop.permute.xlu0 %373
  %vm375 = vcmp.lt.s32.totalorder %v95, 111
  %v376 = vsel %vm375, %v372, %v374
  %v377 = vsel %vm375, %v370, %v372
  %v378 = vsel %vm375, %v368, %v370
  %v379 = vsel %vm375, %v374, %v368
  %s380 = scalar_lea.vmem %s7, 32
  %v381 = vld [vmem:[%s380] sm:$0xf]
  %v383 = vlaneseq
  %v384 = vshrl.u32 %v383, 7
  %v385 = vsub.s32 0, %v384
  %v386 = vrot.slane %v381, %v385
  %v387 = vlaneseq
  %v388 = vshrl.u32 %v387, 7
  %v389 = vsub.s32 1, %v388
  %v390 = vrot.slane %v381, %v389
  %v391 = vlaneseq
  %v392 = vshrl.u32 %v391, 7
  %v393 = vsub.s32 2, %v392
  %v394 = vrot.slane %v381, %v393
  %v395 = vlaneseq
  %v396 = vshrl.u32 %v395, 7
  %v397 = vsub.s32 3, %v396
  %v398 = vrot.slane %v381, %v397
  %v403 = vmul.f32 %v378, %v386
  %v404 = vmul.f32 %v377, %v390
  %v405 = vmul.f32 %v376, %v394
  %v406 = vmul.f32 %v379, %v398
  %v407 = vpack.c.bf16 %v163, %v123
  %v408 = vpack.c.bf16 %v164, %v124
  %v409 = vpack.c.bf16 %v165, %v125
  %v410 = vpack.c.bf16 %v166, %v126
  %v411 = vpack.c.bf16 %v243, %v203
  %v412 = vpack.c.bf16 %v244, %v204
  %v413 = vpack.c.bf16 %v245, %v205
  %v414 = vpack.c.bf16 %v246, %v206
  %v415 = vpack.c.bf16 %v283, %v82
  %v416 = vpack.c.bf16 %v284, %v83
  %v417 = vpack.c.bf16 %v285, %v84
  %v418 = vpack.c.bf16 %v286, %v85
  %v419 = vpack.c.bf16 %v363, %v323
  %v420 = vpack.c.bf16 %v364, %v324
  %v421 = vpack.c.bf16 %v365, %v325
  %v422 = vpack.c.bf16 %v366, %v326
  %v423 = vpack.c.bf16 %v403, %v403
  %v424 = vpack.c.bf16 %v404, %v404
  %v425 = vpack.c.bf16 %v405, %v405
  %v426 = vpack.c.bf16 %v406, %v406
  %v427 = vld [vmem:[%s1] sm:$0xf]
  %v428 = vld [vmem:[%s2] sm:$0xff]
  %430 = vset.pattern.permute.xlu0 0
  %431 = vperm.xlu0 %430, %v428
  %v432 = vpop.permute.xlu0 %431
  %vm434 = vcmask 588800
  %v436 = vsel %vm434, %v427, 0
  %vm438 = vcmask 1043456
  %v440 = vsel %vm438, %v423, 0
  %v443 = vsel %vm438, %v424, 0
  %v446 = vsel %vm438, %v425, 0
  %v449 = vsel %vm438, %v426, 0
  %451 = vmatprep.subr.bf16.mxu0 0
  %452 = vmatpush1.bf16.msra.mxu0 0
  %453 = vmatprep.subr.bf16.mxu0 0
  %454 = vmatpush1.bf16.msra.mxu0 0
  %455 = vmatprep.subr.bf16.mxu0 0
  %456 = vmatpush1.bf16.msra.mxu0 0
  %457 = vmatprep.subr.bf16.mxu0 %v443
  %458 = vmatpush1.bf16.msra.mxu0 %v440
  %459 = vmatprep.subr.bf16.mxu0 %v420
  %460 = vmatpush1.bf16.msra.mxu0 %v419
  %461 = vmatprep.subr.bf16.mxu0 %v416
  %462 = vmatpush1.bf16.msra.mxu0 %v415
  %463 = vmatprep.subr.bf16.mxu0 %v412
  %464 = vmatpush1.bf16.msra.mxu0 %v411
  %465 = vmatprep.subr.bf16.mxu0 %v408
  %466 = vmatpush1.bf16.msra.mxu0 %v407
  %467 = vmatprep.subr.bf16.mxu0 0
  %468 = vmatpush2.bf16.msra.mxu0 0
  %469 = vmatprep.subr.bf16.mxu0 0
  %470 = vmatpush2.bf16.msra.mxu0 0
  %471 = vmatprep.subr.bf16.mxu0 0
  %472 = vmatpush2.bf16.msra.mxu0 0
  %473 = vmatprep.subr.bf16.mxu0 0
  %474 = vmatpush2.bf16.msra.mxu0 0
  %475 = vmatprep.subr.bf16.mxu0 0
  %476 = vmatpush2.bf16.msra.mxu0 0
  %477 = vmatprep.subr.bf16.mxu0 0
  %478 = vmatpush2.bf16.msra.mxu0 0
  %479 = vmatprep.subr.bf16.mxu0 0
  %480 = vmatpush2.bf16.msra.mxu0 0
  %481 = vmatprep.subr.bf16.mxu0 0
  %482 = vmatpush2.bf16.msra.mxu0 0
  %483 = vmatprep.mubr.bf16.mxu0 0
  %484 = vmatmul.mubr.bf16.gmra.mxu0 %v436
  %v485 = vpop.f32.mrf.mxu0
  %v486 = vadd.f32 %v432, %v485
  %v487 = vpop.f32.mrf.mxu0
  %v488 = vadd.f32 %v432, %v487
  %v489 = vpop.f32.mrf.mxu0
  %v490 = vpop.f32.mrf.mxu0
  %491 = vdwg.mxu0
  %492 = vmatprep.subr.bf16.mxu0 0
  %493 = vmatpush1.bf16.msra.mxu0 0
  %494 = vmatprep.subr.bf16.mxu0 0
  %495 = vmatpush1.bf16.msra.mxu0 0
  %496 = vmatprep.subr.bf16.mxu0 0
  %497 = vmatpush1.bf16.msra.mxu0 0
  %498 = vmatprep.subr.bf16.mxu0 %v449
  %499 = vmatpush1.bf16.msra.mxu0 %v446
  %500 = vmatprep.subr.bf16.mxu0 %v422
  %501 = vmatpush1.bf16.msra.mxu0 %v421
  %502 = vmatprep.subr.bf16.mxu0 %v418
  %503 = vmatpush1.bf16.msra.mxu0 %v417
  %504 = vmatprep.subr.bf16.mxu0 %v414
  %505 = vmatpush1.bf16.msra.mxu0 %v413
  %506 = vmatprep.subr.bf16.mxu0 %v410
  %507 = vmatpush1.bf16.msra.mxu0 %v409
  %508 = vmatprep.subr.bf16.mxu0 0
  %509 = vmatpush2.bf16.msra.mxu0 0
  %510 = vmatprep.subr.bf16.mxu0 0
  %511 = vmatpush2.bf16.msra.mxu0 0
  %512 = vmatprep.subr.bf16.mxu0 0
  %513 = vmatpush2.bf16.msra.mxu0 0
  %514 = vmatprep.subr.bf16.mxu0 0
  %515 = vmatpush2.bf16.msra.mxu0 0
  %516 = vmatprep.subr.bf16.mxu0 0
  %517 = vmatpush2.bf16.msra.mxu0 0
  %518 = vmatprep.subr.bf16.mxu0 0
  %519 = vmatpush2.bf16.msra.mxu0 0
  %520 = vmatprep.subr.bf16.mxu0 0
  %521 = vmatpush2.bf16.msra.mxu0 0
  %522 = vmatprep.subr.bf16.mxu0 0
  %523 = vmatpush2.bf16.msra.mxu0 0
  %524 = vmatprep.mubr.bf16.mxu0 0
  %525 = vmatmul.mubr.bf16.gmra.mxu0 %v436
  %v526 = vpop.f32.mrf.mxu0
  %v527 = vadd.f32 %v432, %v526
  %v528 = vpop.f32.mrf.mxu0
  %v529 = vadd.f32 %v432, %v528
  %v530 = vpop.f32.mrf.mxu0
  %v531 = vpop.f32.mrf.mxu0
  %532 = vdwg.mxu0
  %v533 = vld [vmem:[#allocation4] sm:$0xff]
  %v534 = vadd.f32 %v486, %v488
  %v535 = vadd.f32 %v534, %v527
  %v536 = vadd.f32 %v535, %v529
  %537 = vadd.xlane.f32.xlu0 %v536
  %v538 = vpop.xlane.xlu0 %537
  %v539 = vadd.f32 %v533, %v538
  %vm540 = vcmask 7168
  %541 = vst.msk [vmem:[#allocation4] sm:$0xff] %vm540, %v539
  %v542 = vld [vmem:[#allocation5] sm:$0xff]
  %v543 = vmul.f32 %v486, %v486
  %v544 = vmul.f32 %v488, %v488
  %v545 = vmul.f32 %v527, %v527
  %v546 = vmul.f32 %v529, %v529
  %v547 = vadd.f32 %v543, %v544
  %v548 = vadd.f32 %v547, %v545
  %v549 = vadd.f32 %v548, %v546
  %550 = vadd.xlane.f32.xlu0 %v549
  %v551 = vpop.xlane.xlu0 %550
  %v552 = vadd.f32 %v542, %v551
  %553 = vst.msk [vmem:[#allocation5] sm:$0xff] %vm540, %v552
  %v554 = vpack.c.bf16 %v486, %v486
  %v555 = vpack.c.bf16 %v488, %v488
  %v556 = vpack.c.bf16 %v527, %v527
  %v557 = vpack.c.bf16 %v529, %v529
  %v562 = vunpack.c.l.b16 %v554
  %v563 = vunpack.c.l.b16 %v555
  %v564 = vunpack.c.l.b16 %v556
  %v565 = vunpack.c.l.b16 %v557
  %v566 = vpack.c.b16 %v563, %v562
  %v567 = vpack.c.b16 %v565, %v564
  %570 = vst [vmem:[%s8] sm:$0xff] %v566
  %571 = vst [vmem:[%s8 + $0x8] sm:$0xff] %v567
  // Predicated region
  $region38: #{cov_forward.4} parent=0 // pred_check
    %p572 = pneg %p33
  $region39: #{cov_forward.4} parent=0 // pred_check_branch
    %574 = sbr.rel (%p572) target = $region41
  $region40: #{cov_forward.4} parent=0 // pred_region
    %v575 = vld [vmem:[#allocation4] sm:$0xff]
    %576 = vst.msk [vmem:[%s9] sm:$0xff] %vm540, %v575
    %v577 = vld [vmem:[#allocation5] sm:$0xff]
    %578 = vst.msk [vmem:[%s10] sm:$0xff] %vm540, %v577
  $region41: #{cov_forward.4} parent=0 // pred_fallthru
    _
  // Predicated region
  $region42: #{cov_forward.4} parent=0 // pred_check
    _
  $region43: #{cov_forward.4} parent=0 // pred_check_branch
    %580 = sbr.rel (0) target = $region45
  $region44: #{cov_forward.4} parent=0 // pred_region
    _
  $region45: #{cov_forward.4} parent=0 // pred_fallthru
    _
  // Predicated region
  $region46: #{cov_forward.4} parent=0 // pred_check
    _
  $region47: #{cov_forward.4} parent=0 // pred_check_branch
    %582 = sbr.rel (0) target = $region49
  $region48: #{cov_forward.4} parent=0 // pred_region
    _
  $region49: #{cov_forward.4} parent=0 // pred_fallthru
    _
  // Predicated region
  $region50: #{cov_forward.4} parent=0 // pred_check
    _
  $region51: #{cov_forward.4} parent=0 // pred_check_branch
    %584 = sbr.rel (0) target = $region53
  $region52: #{cov_forward.4} parent=0 // pred_region
    _
  $region53: #{cov_forward.4} parent=0 // pred_fallthru
    _
  // Predicated region
  $region54: #{cov_forward.4} parent=0 // pred_check
    _
  $region55: #{cov_forward.4} parent=0 // pred_check_branch
    %586 = sbr.rel (0) target = $region57
  $region56: #{cov_forward.4} parent=0 // pred_region
    _
  $region57: #{cov_forward.4} parent=0 // pred_fallthru
    _
  // Predicated region
  $region58: #{cov_forward.4} parent=0 // pred_check
    _
  $region59: #{cov_forward.4} parent=0 // pred_check_branch
    %588 = sbr.rel (0) target = $region61
  $region60: #{cov_forward.4} parent=0 // pred_region
    _
  $region61: #{cov_forward.4} parent=0 // pred_fallthru
    _
  // Predicated region
  $region62: #{cov_forward.4} parent=0 // pred_check
    _
  $region63: #{cov_forward.4} parent=0 // pred_check_branch
    %590 = sbr.rel (0) target = $region65
  $region64: #{cov_forward.4} parent=0 // pred_region
    _
  $region65: #{cov_forward.4} parent=0 // pred_fallthru
    _

// kernel: cov_forward.3
$region0: #{cov_forward.3}
  #allocation0 [shape = 'u32[]', space=smem, size = 0x4, offset = 0x4, fixed_abs, tag = 'smem constant byte address 0x4 - core index']
  #allocation1 [shape = 'u32[144,128]{1,0:T(1,128)}', space=vmem, size = 0x12000, scoped, tag = 'internal scratch']
  #allocation2 [shape = 'f32[8,1]{1,0:T(8,128)}', space=vmem, size = 0x1000, scoped, tag = 'scratch operand']
  #allocation3 [shape = 'f32[8,1]{1,0:T(8,128)}', space=vmem, size = 0x1000, scoped, tag = 'scratch operand']
  #allocation4 [shape = 'f32[8,1]{1,0:T(8,128)}', space=vmem, size = 0x1000, scoped, tag = 'scratch operand']
  #allocation5 [shape = 'f32[8,1]{1,0:T(8,128)}', space=vmem, size = 0x1000, scoped, tag = 'scratch operand']
  %s0 = inlined_call_operand.vmem [shape: f32[8,512], index: 0, kind: input, shape index: {}]
  %s1 = inlined_call_operand.vmem [shape: bf16[8,72], index: 1, kind: input, shape index: {}]
  %s2 = inlined_call_operand.vmem [shape: f32[8,1], index: 2, kind: input, shape index: {}]
  %s3 = inlined_call_operand.vmem [shape: f32[8,1], index: 3, kind: input, shape index: {}, may-alias: {3,4,5,6}]
  %s4 = inlined_call_operand.vmem [shape: f32[8,1], index: 4, kind: input, shape index: {}, may-alias: {3,4,5,6}]
  %s5 = inlined_call_operand.vmem [shape: f32[8,1], index: 5, kind: input, shape index: {}, may-alias: {3,4,5,6}]
  %s6 = inlined_call_operand.vmem [shape: f32[8,1], index: 6, kind: input, shape index: {}, may-alias: {3,4,5,6}]
  %s7 = inlined_call_operand.vmem [shape: f32[9,1,512], index: 7, kind: input, shape index: {}]
  %s8 = inlined_call_operand.vmem [shape: bf16[8,512], index: 8, kind: output, shape index: {0}]
  %s9 = inlined_call_operand.vmem [shape: f32[8,1], index: 9, kind: output, shape index: {1}]
  %s10 = inlined_call_operand.vmem [shape: f32[8,1], index: 10, kind: output, shape index: {2}]
  %11 = xla_tuple %s8, %s9, %s10
  %s12 = sld [smem:[#allocation0]]
  $region66: #{cov_forward.3} parent=0
    _
  %s14 = ssub.s32 1, %s12
  %s15 = scalar_select 0, %s14, %s12
  // Predicated region
  $region2: #{cov_forward.3} parent=0 // pred_check
    _
  $region3: #{cov_forward.3} parent=0 // pred_check_branch
    %17 = sbr.rel (0) target = $region5
  $region4: #{cov_forward.3} parent=0 // pred_region
    _
  $region5: #{cov_forward.3} parent=0 // pred_fallthru
    _
  // Predicated region
  $region6: #{cov_forward.3} parent=0 // pred_check
    _
  $region7: #{cov_forward.3} parent=0 // pred_check_branch
    %19 = sbr.rel (0) target = $region9
  $region8: #{cov_forward.3} parent=0 // pred_region
    _
  $region9: #{cov_forward.3} parent=0 // pred_fallthru
    _
  // Predicated region
  $region10: #{cov_forward.3} parent=0 // pred_check
    _
  $region11: #{cov_forward.3} parent=0 // pred_check_branch
    %21 = sbr.rel (0) target = $region13
  $region12: #{cov_forward.3} parent=0 // pred_region
    _
  $region13: #{cov_forward.3} parent=0 // pred_fallthru
    _
  // Predicated region
  $region14: #{cov_forward.3} parent=0 // pred_check
    _
  $region15: #{cov_forward.3} parent=0 // pred_check_branch
    %23 = sbr.rel (0) target = $region17
  $region16: #{cov_forward.3} parent=0 // pred_region
    _
  $region17: #{cov_forward.3} parent=0 // pred_fallthru
    _
  // Predicated region
  $region18: #{cov_forward.3} parent=0 // pred_check
    _
  $region19: #{cov_forward.3} parent=0 // pred_check_branch
    %25 = sbr.rel (0) target = $region21
  $region20: #{cov_forward.3} parent=0 // pred_region
    _
  $region21: #{cov_forward.3} parent=0 // pred_fallthru
    _
  // Predicated region
  $region22: #{cov_forward.3} parent=0 // pred_check
    _
  $region23: #{cov_forward.3} parent=0 // pred_check_branch
    %27 = sbr.rel (0) target = $region25
  $region24: #{cov_forward.3} parent=0 // pred_region
    _
  $region25: #{cov_forward.3} parent=0 // pred_fallthru
    _
  // Predicated region
  $region26: #{cov_forward.3} parent=0 // pred_check
    _
  $region27: #{cov_forward.3} parent=0 // pred_check_branch
    %29 = sbr.rel (0) target = $region29
  $region28: #{cov_forward.3} parent=0 // pred_region
    _
  $region29: #{cov_forward.3} parent=0 // pred_fallthru
    _
  // Predicated region
  $region30: #{cov_forward.3} parent=0 // pred_check
    _
  $region31: #{cov_forward.3} parent=0 // pred_check_branch
    %31 = sbr.rel (0) target = $region33
  $region32: #{cov_forward.3} parent=0 // pred_region
    _
  $region33: #{cov_forward.3} parent=0 // pred_fallthru
    _
  %p33 = scmp.eq.s32.totalorder 0, 0
  // Predicated region
  $region34: #{cov_forward.3} parent=0 // pred_check
    %p34 = pneg %p33
  $region35: #{cov_forward.3} parent=0 // pred_check_branch
    %36 = sbr.rel (%p34) target = $region37
  $region36: #{cov_forward.3} parent=0 // pred_region
    %vm37 = vcmask 7168
    %38 = vst.msk [vmem:[#allocation4] sm:$0xff] %vm37, 0.0
    %39 = vst.msk [vmem:[#allocation5] sm:$0xff] %vm37, 0.0
  $region37: #{cov_forward.3} parent=0 // pred_fallthru
    _
  %v40 = vld [vmem:[%s0] sm:$0xff]
  %v41 = vld [vmem:[%s0 + $0x8] sm:$0xff]
  %v42 = vld [vmem:[%s0 + $0x10] sm:$0xff]
  %v43 = vld [vmem:[%s0 + $0x18] sm:$0xff]
  %44 = vrot.lane.b32.xlu0 %v40, 17
  %v45 = vpop.permute.xlu0 %44
  %46 = vrot.lane.b32.xlu0 %v41, 17
  %v47 = vpop.permute.xlu0 %46
  %48 = vrot.lane.b32.xlu0 %v42, 17
  %v49 = vpop.permute.xlu0 %48
  %50 = vrot.lane.b32.xlu0 %v43, 17
  %v51 = vpop.permute.xlu0 %50
  %v52 = vlaneseq
  %v53 = vand.u32 %v52, 127
  %vm54 = vcmp.lt.s32.totalorder %v53, 17
  %v55 = vsel %vm54, %v49, %v51
  %v56 = vsel %vm54, %v47, %v49
  %v57 = vsel %vm54, %v45, %v47
  %v58 = vsel %vm54, %v51, %v45
  %v59 = vld [vmem:[%s7] sm:$0xf]
  %v61 = vlaneseq
  %v62 = vshrl.u32 %v61, 7
  %v63 = vsub.s32 0, %v62
  %v64 = vrot.slane %v59, %v63
  %v65 = vlaneseq
  %v66 = vshrl.u32 %v65, 7
  %v67 = vsub.s32 1, %v66
  %v68 = vrot.slane %v59, %v67
  %v69 = vlaneseq
  %v70 = vshrl.u32 %v69, 7
  %v71 = vsub.s32 2, %v70
  %v72 = vrot.slane %v59, %v71
  %v73 = vlaneseq
  %v74 = vshrl.u32 %v73, 7
  %v75 = vsub.s32 3, %v74
  %v76 = vrot.slane %v59, %v75
  %v81 = vmul.f32 %v58, %v64
  %v82 = vmul.f32 %v57, %v68
  %v83 = vmul.f32 %v56, %v72
  %v84 = vmul.f32 %v55, %v76
  %85 = vrot.lane.b32.xlu0 %v40, 16
  %v86 = vpop.permute.xlu0 %85
  %87 = vrot.lane.b32.xlu0 %v41, 16
  %v88 = vpop.permute.xlu0 %87
  %89 = vrot.lane.b32.xlu0 %v42, 16
  %v90 = vpop.permute.xlu0 %89
  %91 = vrot.lane.b32.xlu0 %v43, 16
  %v92 = vpop.permute.xlu0 %91
  %vm93 = vcmp.lt.s32.totalorder %v53, 16
  %v94 = vsel %vm93, %v90, %v92
  %v95 = vsel %vm93, %v88, %v90
  %v96 = vsel %vm93, %v86, %v88
  %v97 = vsel %vm93, %v92, %v86
  %s98 = scalar_lea.vmem %s7, 4
  %v99 = vld [vmem:[%s98] sm:$0xf]
  %v101 = vlaneseq
  %v102 = vshrl.u32 %v101, 7
  %v103 = vsub.s32 0, %v102
  %v104 = vrot.slane %v99, %v103
  %v105 = vlaneseq
  %v106 = vshrl.u32 %v105, 7
  %v107 = vsub.s32 1, %v106
  %v108 = vrot.slane %v99, %v107
  %v109 = vlaneseq
  %v110 = vshrl.u32 %v109, 7
  %v111 = vsub.s32 2, %v110
  %v112 = vrot.slane %v99, %v111
  %v113 = vlaneseq
  %v114 = vshrl.u32 %v113, 7
  %v115 = vsub.s32 3, %v114
  %v116 = vrot.slane %v99, %v115
  %v121 = vmul.f32 %v97, %v104
  %v122 = vmul.f32 %v96, %v108
  %v123 = vmul.f32 %v95, %v112
  %v124 = vmul.f32 %v94, %v116
  %125 = vrot.lane.b32.xlu0 %v40, 15
  %v126 = vpop.permute.xlu0 %125
  %127 = vrot.lane.b32.xlu0 %v41, 15
  %v128 = vpop.permute.xlu0 %127
  %129 = vrot.lane.b32.xlu0 %v42, 15
  %v130 = vpop.permute.xlu0 %129
  %131 = vrot.lane.b32.xlu0 %v43, 15
  %v132 = vpop.permute.xlu0 %131
  %vm133 = vcmp.lt.s32.totalorder %v53, 15
  %v134 = vsel %vm133, %v130, %v132
  %v135 = vsel %vm133, %v128, %v130
  %v136 = vsel %vm133, %v126, %v128
  %v137 = vsel %vm133, %v132, %v126
  %s138 = scalar_lea.vmem %s7, 8
  %v139 = vld [vmem:[%s138] sm:$0xf]
  %v141 = vlaneseq
  %v142 = vshrl.u32 %v141, 7
  %v143 = vsub.s32 0, %v142
  %v144 = vrot.slane %v139, %v143
  %v145 = vlaneseq
  %v146 = vshrl.u32 %v145, 7
  %v147 = vsub.s32 1, %v146
  %v148 = vrot.slane %v139, %v147
  %v149 = vlaneseq
  %v150 = vshrl.u32 %v149, 7
  %v151 = vsub.s32 2, %v150
  %v152 = vrot.slane %v139, %v151
  %v153 = vlaneseq
  %v154 = vshrl.u32 %v153, 7
  %v155 = vsub.s32 3, %v154
  %v156 = vrot.slane %v139, %v155
  %v161 = vmul.f32 %v137, %v144
  %v162 = vmul.f32 %v136, %v148
  %v163 = vmul.f32 %v135, %v152
  %v164 = vmul.f32 %v134, %v156
  %165 = vrot.lane.b32.xlu0 %v40, 1
  %v166 = vpop.permute.xlu0 %165
  %167 = vrot.lane.b32.xlu0 %v41, 1
  %v168 = vpop.permute.xlu0 %167
  %169 = vrot.lane.b32.xlu0 %v42, 1
  %v170 = vpop.permute.xlu0 %169
  %171 = vrot.lane.b32.xlu0 %v43, 1
  %v172 = vpop.permute.xlu0 %171
  %vm173 = vcmp.lt.s32.totalorder %v53, 1
  %v174 = vsel %vm173, %v170, %v172
  %v175 = vsel %vm173, %v168, %v170
  %v176 = vsel %vm173, %v166, %v168
  %v177 = vsel %vm173, %v172, %v166
  %s178 = scalar_lea.vmem %s7, 12
  %v179 = vld [vmem:[%s178] sm:$0xf]
  %v181 = vlaneseq
  %v182 = vshrl.u32 %v181, 7
  %v183 = vsub.s32 0, %v182
  %v184 = vrot.slane %v179, %v183
  %v185 = vlaneseq
  %v186 = vshrl.u32 %v185, 7
  %v187 = vsub.s32 1, %v186
  %v188 = vrot.slane %v179, %v187
  %v189 = vlaneseq
  %v190 = vshrl.u32 %v189, 7
  %v191 = vsub.s32 2, %v190
  %v192 = vrot.slane %v179, %v191
  %v193 = vlaneseq
  %v194 = vshrl.u32 %v193, 7
  %v195 = vsub.s32 3, %v194
  %v196 = vrot.slane %v179, %v195
  %v201 = vmul.f32 %v177, %v184
  %v202 = vmul.f32 %v176, %v188
  %v203 = vmul.f32 %v175, %v192
  %v204 = vmul.f32 %v174, %v196
  %205 = vrot.lane.b32.xlu0 %v40, 127
  %v206 = vpop.permute.xlu0 %205
  %207 = vrot.lane.b32.xlu0 %v41, 127
  %v208 = vpop.permute.xlu0 %207
  %209 = vrot.lane.b32.xlu0 %v42, 127
  %v210 = vpop.permute.xlu0 %209
  %211 = vrot.lane.b32.xlu0 %v43, 127
  %v212 = vpop.permute.xlu0 %211
  %vm213 = vcmp.lt.s32.totalorder %v53, 127
  %v214 = vsel %vm213, %v210, %v212
  %v215 = vsel %vm213, %v208, %v210
  %v216 = vsel %vm213, %v206, %v208
  %v217 = vsel %vm213, %v212, %v206
  %s218 = scalar_lea.vmem %s7, 20
  %v219 = vld [vmem:[%s218] sm:$0xf]
  %v221 = vlaneseq
  %v222 = vshrl.u32 %v221, 7
  %v223 = vsub.s32 0, %v222
  %v224 = vrot.slane %v219, %v223
  %v225 = vlaneseq
  %v226 = vshrl.u32 %v225, 7
  %v227 = vsub.s32 1, %v226
  %v228 = vrot.slane %v219, %v227
  %v229 = vlaneseq
  %v230 = vshrl.u32 %v229, 7
  %v231 = vsub.s32 2, %v230
  %v232 = vrot.slane %v219, %v231
  %v233 = vlaneseq
  %v234 = vshrl.u32 %v233, 7
  %v235 = vsub.s32 3, %v234
  %v236 = vrot.slane %v219, %v235
  %v241 = vmul.f32 %v216, %v224
  %v242 = vmul.f32 %v215, %v228
  %v243 = vmul.f32 %v214, %v232
  %v244 = vmul.f32 %v217, %v236
  %245 = vrot.lane.b32.xlu0 %v40, 113
  %v246 = vpop.permute.xlu0 %245
  %247 = vrot.lane.b32.xlu0 %v41, 113
  %v248 = vpop.permute.xlu0 %247
  %249 = vrot.lane.b32.xlu0 %v42, 113
  %v250 = vpop.permute.xlu0 %249
  %251 = vrot.lane.b32.xlu0 %v43, 113
  %v252 = vpop.permute.xlu0 %251
  %vm253 = vcmp.lt.s32.totalorder %v53, 113
  %v254 = vsel %vm253, %v250, %v252
  %v255 = vsel %vm253, %v248, %v250
  %v256 = vsel %vm253, %v246, %v248
  %v257 = vsel %vm253, %v252, %v246
  %s258 = scalar_lea.vmem %s7, 24
  %v259 = vld [vmem:[%s258] sm:$0xf]
  %v261 = vlaneseq
  %v262 = vshrl.u32 %v261, 7
  %v263 = vsub.s32 0, %v262
  %v264 = vrot.slane %v259, %v263
  %v265 = vlaneseq
  %v266 = vshrl.u32 %v265, 7
  %v267 = vsub.s32 1, %v266
  %v268 = vrot.slane %v259, %v267
  %v269 = vlaneseq
  %v270 = vshrl.u32 %v269, 7
  %v271 = vsub.s32 2, %v270
  %v272 = vrot.slane %v259, %v271
  %v273 = vlaneseq
  %v274 = vshrl.u32 %v273, 7
  %v275 = vsub.s32 3, %v274
  %v276 = vrot.slane %v259, %v275
  %v281 = vmul.f32 %v256, %v264
  %v282 = vmul.f32 %v255, %v268
  %v283 = vmul.f32 %v254, %v272
  %v284 = vmul.f32 %v257, %v276
  %285 = vrot.lane.b32.xlu0 %v40, 112
  %v286 = vpop.permute.xlu0 %285
  %287 = vrot.lane.b32.xlu0 %v41, 112
  %v288 = vpop.permute.xlu0 %287
  %289 = vrot.lane.b32.xlu0 %v42, 112
  %v290 = vpop.permute.xlu0 %289
  %291 = vrot.lane.b32.xlu0 %v43, 112
  %v292 = vpop.permute.xlu0 %291
  %vm293 = vcmp.lt.s32.totalorder %v53, 112
  %v294 = vsel %vm293, %v290, %v292
  %v295 = vsel %vm293, %v288, %v290
  %v296 = vsel %vm293, %v286, %v288
  %v297 = vsel %vm293, %v292, %v286
  %s298 = scalar_lea.vmem %s7, 28
  %v299 = vld [vmem:[%s298] sm:$0xf]
  %v301 = vlaneseq
  %v302 = vshrl.u32 %v301, 7
  %v303 = vsub.s32 0, %v302
  %v304 = vrot.slane %v299, %v303
  %v305 = vlaneseq
  %v306 = vshrl.u32 %v305, 7
  %v307 = vsub.s32 1, %v306
  %v308 = vrot.slane %v299, %v307
  %v309 = vlaneseq
  %v310 = vshrl.u32 %v309, 7
  %v311 = vsub.s32 2, %v310
  %v312 = vrot.slane %v299, %v311
  %v313 = vlaneseq
  %v314 = vshrl.u32 %v313, 7
  %v315 = vsub.s32 3, %v314
  %v316 = vrot.slane %v299, %v315
  %v321 = vmul.f32 %v296, %v304
  %v322 = vmul.f32 %v295, %v308
  %v323 = vmul.f32 %v294, %v312
  %v324 = vmul.f32 %v297, %v316
  %325 = vrot.lane.b32.xlu0 %v40, 111
  %v326 = vpop.permute.xlu0 %325
  %327 = vrot.lane.b32.xlu0 %v41, 111
  %v328 = vpop.permute.xlu0 %327
  %329 = vrot.lane.b32.xlu0 %v42, 111
  %v330 = vpop.permute.xlu0 %329
  %331 = vrot.lane.b32.xlu0 %v43, 111
  %v332 = vpop.permute.xlu0 %331
  %vm333 = vcmp.lt.s32.totalorder %v53, 111
  %v334 = vsel %vm333, %v330, %v332
  %v335 = vsel %vm333, %v328, %v330
  %v336 = vsel %vm333, %v326, %v328
  %v337 = vsel %vm333, %v332, %v326
  %s338 = scalar_lea.vmem %s7, 32
  %v339 = vld [vmem:[%s338] sm:$0xf]
  %v341 = vlaneseq
  %v342 = vshrl.u32 %v341, 7
  %v343 = vsub.s32 0, %v342
  %v344 = vrot.slane %v339, %v343
  %v345 = vlaneseq
  %v346 = vshrl.u32 %v345, 7
  %v347 = vsub.s32 1, %v346
  %v348 = vrot.slane %v339, %v347
  %v349 = vlaneseq
  %v350 = vshrl.u32 %v349, 7
  %v351 = vsub.s32 2, %v350
  %v352 = vrot.slane %v339, %v351
  %v353 = vlaneseq
  %v354 = vshrl.u32 %v353, 7
  %v355 = vsub.s32 3, %v354
  %v356 = vrot.slane %v339, %v355
  %v361 = vmul.f32 %v336, %v344
  %v362 = vmul.f32 %v335, %v348
  %v363 = vmul.f32 %v334, %v352
  %v364 = vmul.f32 %v337, %v356
  %v365 = vpack.c.bf16 %v121, %v81
  %v366 = vpack.c.bf16 %v122, %v82
  %v367 = vpack.c.bf16 %v123, %v83
  %v368 = vpack.c.bf16 %v124, %v84
  %v369 = vpack.c.bf16 %v201, %v161
  %v370 = vpack.c.bf16 %v202, %v162
  %v371 = vpack.c.bf16 %v203, %v163
  %v372 = vpack.c.bf16 %v204, %v164
  %v373 = vpack.c.bf16 %v241, %v40
  %v374 = vpack.c.bf16 %v242, %v41
  %v375 = vpack.c.bf16 %v243, %v42
  %v376 = vpack.c.bf16 %v244, %v43
  %v377 = vpack.c.bf16 %v321, %v281
  %v378 = vpack.c.bf16 %v322, %v282
  %v379 = vpack.c.bf16 %v323, %v283
  %v380 = vpack.c.bf16 %v324, %v284
  %v381 = vpack.c.bf16 %v361, %v361
  %v382 = vpack.c.bf16 %v362, %v362
  %v383 = vpack.c.bf16 %v363, %v363
  %v384 = vpack.c.bf16 %v364, %v364
  %v385 = vld [vmem:[%s1] sm:$0xf]
  %v386 = vld [vmem:[%s2] sm:$0xff]
  %388 = vset.pattern.permute.xlu0 0
  %389 = vperm.xlu0 %388, %v386
  %v390 = vpop.permute.xlu0 %389
  %vm392 = vcmask 588800
  %v394 = vsel %vm392, %v385, 0
  %vm396 = vcmask 1043456
  %v398 = vsel %vm396, %v381, 0
  %v401 = vsel %vm396, %v382, 0
  %v404 = vsel %vm396, %v383, 0
  %v407 = vsel %vm396, %v384, 0
  %409 = vmatprep.subr.bf16.mxu0 0
  %410 = vmatpush1.bf16.msra.mxu0 0
  %411 = vmatprep.subr.bf16.mxu0 0
  %412 = vmatpush1.bf16.msra.mxu0 0
  %413 = vmatprep.subr.bf16.mxu0 0
  %414 = vmatpush1.bf16.msra.mxu0 0
  %415 = vmatprep.subr.bf16.mxu0 %v401
  %416 = vmatpush1.bf16.msra.mxu0 %v398
  %417 = vmatprep.subr.bf16.mxu0 %v378
  %418 = vmatpush1.bf16.msra.mxu0 %v377
  %419 = vmatprep.subr.bf16.mxu0 %v374
  %420 = vmatpush1.bf16.msra.mxu0 %v373
  %421 = vmatprep.subr.bf16.mxu0 %v370
  %422 = vmatpush1.bf16.msra.mxu0 %v369
  %423 = vmatprep.subr.bf16.mxu0 %v366
  %424 = vmatpush1.bf16.msra.mxu0 %v365
  %425 = vmatprep.subr.bf16.mxu0 0
  %426 = vmatpush2.bf16.msra.mxu0 0
  %427 = vmatprep.subr.bf16.mxu0 0
  %428 = vmatpush2.bf16.msra.mxu0 0
  %429 = vmatprep.subr.bf16.mxu0 0
  %430 = vmatpush2.bf16.msra.mxu0 0
  %431 = vmatprep.subr.bf16.mxu0 0
  %432 = vmatpush2.bf16.msra.mxu0 0
  %433 = vmatprep.subr.bf16.mxu0 0
  %434 = vmatpush2.bf16.msra.mxu0 0
  %435 = vmatprep.subr.bf16.mxu0 0
  %436 = vmatpush2.bf16.msra.mxu0 0
  %437 = vmatprep.subr.bf16.mxu0 0
  %438 = vmatpush2.bf16.msra.mxu0 0
  %439 = vmatprep.subr.bf16.mxu0 0
  %440 = vmatpush2.bf16.msra.mxu0 0
  %441 = vmatprep.mubr.bf16.mxu0 0
  %442 = vmatmul.mubr.bf16.gmra.mxu0 %v394
  %v443 = vpop.f32.mrf.mxu0
  %v444 = vadd.f32 %v390, %v443
  %v445 = vpop.f32.mrf.mxu0
  %v446 = vadd.f32 %v390, %v445
  %v447 = vpop.f32.mrf.mxu0
  %v448 = vpop.f32.mrf.mxu0
  %449 = vdwg.mxu0
  %450 = vmatprep.subr.bf16.mxu0 0
  %451 = vmatpush1.bf16.msra.mxu0 0
  %452 = vmatprep.subr.bf16.mxu0 0
  %453 = vmatpush1.bf16.msra.mxu0 0
  %454 = vmatprep.subr.bf16.mxu0 0
  %455 = vmatpush1.bf16.msra.mxu0 0
  %456 = vmatprep.subr.bf16.mxu0 %v407
  %457 = vmatpush1.bf16.msra.mxu0 %v404
  %458 = vmatprep.subr.bf16.mxu0 %v380
  %459 = vmatpush1.bf16.msra.mxu0 %v379
  %460 = vmatprep.subr.bf16.mxu0 %v376
  %461 = vmatpush1.bf16.msra.mxu0 %v375
  %462 = vmatprep.subr.bf16.mxu0 %v372
  %463 = vmatpush1.bf16.msra.mxu0 %v371
  %464 = vmatprep.subr.bf16.mxu0 %v368
  %465 = vmatpush1.bf16.msra.mxu0 %v367
  %466 = vmatprep.subr.bf16.mxu0 0
  %467 = vmatpush2.bf16.msra.mxu0 0
  %468 = vmatprep.subr.bf16.mxu0 0
  %469 = vmatpush2.bf16.msra.mxu0 0
  %470 = vmatprep.subr.bf16.mxu0 0
  %471 = vmatpush2.bf16.msra.mxu0 0
  %472 = vmatprep.subr.bf16.mxu0 0
  %473 = vmatpush2.bf16.msra.mxu0 0
  %474 = vmatprep.subr.bf16.mxu0 0
  %475 = vmatpush2.bf16.msra.mxu0 0
  %476 = vmatprep.subr.bf16.mxu0 0
  %477 = vmatpush2.bf16.msra.mxu0 0
  %478 = vmatprep.subr.bf16.mxu0 0
  %479 = vmatpush2.bf16.msra.mxu0 0
  %480 = vmatprep.subr.bf16.mxu0 0
  %481 = vmatpush2.bf16.msra.mxu0 0
  %482 = vmatprep.mubr.bf16.mxu0 0
  %483 = vmatmul.mubr.bf16.gmra.mxu0 %v394
  %v484 = vpop.f32.mrf.mxu0
  %v485 = vadd.f32 %v390, %v484
  %v486 = vpop.f32.mrf.mxu0
  %v487 = vadd.f32 %v390, %v486
  %v488 = vpop.f32.mrf.mxu0
  %v489 = vpop.f32.mrf.mxu0
  %490 = vdwg.mxu0
  %v491 = vld [vmem:[#allocation4] sm:$0xff]
  %v492 = vadd.f32 %v444, %v446
  %v493 = vadd.f32 %v492, %v485
  %v494 = vadd.f32 %v493, %v487
  %495 = vadd.xlane.f32.xlu0 %v494
  %v496 = vpop.xlane.xlu0 %495
  %v497 = vadd.f32 %v491, %v496
  %vm498 = vcmask 7168
  %499 = vst.msk [vmem:[#allocation4] sm:$0xff] %vm498, %v497
  %v500 = vld [vmem:[#allocation5] sm:$0xff]
  %v501 = vmul.f32 %v444, %v444
  %v502 = vmul.f32 %v446, %v446
  %v503 = vmul.f32 %v485, %v485
  %v504 = vmul.f32 %v487, %v487
  %v505 = vadd.f32 %v501, %v502
  %v506 = vadd.f32 %v505, %v503
  %v507 = vadd.f32 %v506, %v504
  %508 = vadd.xlane.f32.xlu0 %v507
  %v509 = vpop.xlane.xlu0 %508
  %v510 = vadd.f32 %v500, %v509
  %511 = vst.msk [vmem:[#allocation5] sm:$0xff] %vm498, %v510
  %v512 = vpack.c.bf16 %v444, %v444
  %v513 = vpack.c.bf16 %v446, %v446
  %v514 = vpack.c.bf16 %v485, %v485
  %v515 = vpack.c.bf16 %v487, %v487
  %v520 = vunpack.c.l.b16 %v512
  %v521 = vunpack.c.l.b16 %v513
  %v522 = vunpack.c.l.b16 %v514
  %v523 = vunpack.c.l.b16 %v515
  %v524 = vpack.c.b16 %v521, %v520
  %v525 = vpack.c.b16 %v523, %v522
  %528 = vst [vmem:[%s8] sm:$0xff] %v524
  %529 = vst [vmem:[%s8 + $0x8] sm:$0xff] %v525
  // Predicated region
  $region38: #{cov_forward.3} parent=0 // pred_check
    %p530 = pneg %p33
  $region39: #{cov_forward.3} parent=0 // pred_check_branch
    %532 = sbr.rel (%p530) target = $region41
  $region40: #{cov_forward.3} parent=0 // pred_region
    %v533 = vld [vmem:[#allocation4] sm:$0xff]
    %534 = vst.msk [vmem:[%s9] sm:$0xff] %vm498, %v533
    %v535 = vld [vmem:[#allocation5] sm:$0xff]
    %536 = vst.msk [vmem:[%s10] sm:$0xff] %vm498, %v535
  $region41: #{cov_forward.3} parent=0 // pred_fallthru
    _
  // Predicated region
  $region42: #{cov_forward.3} parent=0 // pred_check
    _
  $region43: #{cov_forward.3} parent=0 // pred_check_branch
    %538 = sbr.rel (0) target = $region45
  $region44: #{cov_forward.3} parent=0 // pred_region
    _
  $region45: #{cov_forward.3} parent=0 // pred_fallthru
    _
  // Predicated region
  $region46: #{cov_forward.3} parent=0 // pred_check
    _
  $region47: #{cov_forward.3} parent=0 // pred_check_branch
    %540 = sbr.rel (0) target = $region49
  $region48: #{cov_forward.3} parent=0 // pred_region
    _
  $region49: #{cov_forward.3} parent=0 // pred_fallthru
    _
  // Predicated region
  $region50: #{cov_forward.3} parent=0 // pred_check
    _
  $region51: #{cov_forward.3} parent=0 // pred_check_branch
    %542 = sbr.rel (0) target = $region53
  $region52: #{cov_forward.3} parent=0 // pred_region
    _
  $region53: #{cov_forward.3} parent=0 // pred_fallthru
    _
  // Predicated region
  $region54: #{cov_forward.3} parent=0 // pred_check
    _
  $region55: #{cov_forward.3} parent=0 // pred_check_branch
    %544 = sbr.rel (0) target = $region57
  $region56: #{cov_forward.3} parent=0 // pred_region
    _
  $region57: #{cov_forward.3} parent=0 // pred_fallthru
    _
  // Predicated region
  $region58: #{cov_forward.3} parent=0 // pred_check
    _
  $region59: #{cov_forward.3} parent=0 // pred_check_branch
    %546 = sbr.rel (0) target = $region61
  $region60: #{cov_forward.3} parent=0 // pred_region
    _
  $region61: #{cov_forward.3} parent=0 // pred_fallthru
    _
  // Predicated region
  $region62: #{cov_forward.3} parent=0 // pred_check
    _
  $region63: #{cov_forward.3} parent=0 // pred_check_branch
    %548 = sbr.rel (0) target = $region65
  $region64: #{cov_forward.3} parent=0 // pred_region
    _
  $region65: #{cov_forward.3} parent=0 // pred_fallthru
    _

</llo_original>
